<compile_context>
chip_gen: v7x
topology: tpu7x:2x2x1
jax: 0.10.0
libtpu: 0.0.40
codegen_flags: <defaults>
</compile_context>

<pallas_src>
import functools

import jax
import jax.numpy as jnp
from jax.experimental import pallas as pl
from jax.experimental.pallas import tpu as pltpu


def _round_up(a: int, b: int) -> int:
    return (a + b - 1) // b * b


def _vmem_capacity_bytes() -> int:
    """Per-core VMEM capacity; 128 MiB (v5e/v6e) default if the query fails."""
    cap = 0
    try:
        info = pltpu.get_tpu_info()
        cap = int(getattr(info, "vmem_capacity_bytes", 0) or 0)
    except Exception:
        cap = 0
    if cap <= 0:
        kind = ""
        try:
            kind = jax.devices()[0].device_kind.lower()
        except Exception:
            pass
        cap = 64 * 1024 * 1024 if ("v7" in kind) else 128 * 1024 * 1024
    return cap


def build_propagation_matrix(edge_index: jnp.ndarray, n_pad: int) -> jnp.ndarray:
    """P[v, u] = 1/deg(v) for edges u -> v, row-normalized, emitted in bf16.

    Padded rows/cols are zero and padded x rows are zero, so padding stays inert.
    """
    src = edge_index[0]
    dst = edge_index[1]
    A = jnp.zeros((n_pad, n_pad), jnp.float32).at[dst, src].add(1.0)
    deg = jnp.maximum(A.sum(axis=1, keepdims=True), 1.0)
    return (A / deg).astype(jnp.bfloat16)


# ----------------------------------------------------------------------------
# Fused path: P resident in VMEM, all hops inside one pallas_call.
# ----------------------------------------------------------------------------
def make_fused_kernel(n_pad: int, d_pad: int, num_wl_iterations: int, step: int,
                      vmem_limit_bytes: int):
    def kernel(p_ref, x0_ref, out_ref):
        # p_ref:  (n_pad, n_pad) bf16 propagation matrix (resident, read once from HBM)
        # x0_ref: (n_pad, d_pad) f32 initial features
        # out_ref: (K+1, n_pad, d_pad) f32 per-iteration feature slabs
        x = x0_ref[...]
        out_ref[0] = x
        for it in range(num_wl_iterations):
            for _ in range(step):
                px = jnp.dot(p_ref[...], x.astype(jnp.bfloat16),
                             preferred_element_type=jnp.float32)
                x = 0.5 * (x + px)          # f32 self term + blend (VPU, negligible)
            out_ref[it + 1] = x

    return pl.pallas_call(
        kernel,
        out_shape=jax.ShapeDtypeStruct((num_wl_iterations + 1, n_pad, d_pad),
                                       jnp.float32),
        compiler_params=pltpu.CompilerParams(vmem_limit_bytes=vmem_limit_bytes),
    )


# ----------------------------------------------------------------------------
# Streamed fallback: one hop per call, row x column (K-reduction) tiled grid.
# ----------------------------------------------------------------------------
def make_streamed_hop_kernel(n_pad: int, d_pad: int, tm: int, tk: int,
                             vmem_limit_bytes: int):
    nk = n_pad // tk

    def kernel(p_ref, xk_ref, xrow_ref, o_ref, acc_ref):
        # p_ref:    (tm, tk)   bf16 streamed tile of P
        # xk_ref:   (tk, d_pad) bf16 column tile of x (matmul operand, cast hoisted)
        # xrow_ref: (tm, d_pad) f32 row tile of x (self term, constant over k)
        # o_ref:    (tm, d_pad) f32 output row tile (lane-dense store)
        # acc_ref:  (tm, d_pad) f32 accumulator scratch
        k = pl.program_id(1)

        @pl.when(k == 0)
        def _():
            acc_ref[...] = jnp.zeros_like(acc_ref)

        acc_ref[...] += jnp.dot(p_ref[...], xk_ref[...],
                                preferred_element_type=jnp.float32)

        @pl.when(k == nk - 1)
        def _():
            o_ref[...] = 0.5 * (xrow_ref[...] + acc_ref[...])

    return pl.pallas_call(
        kernel,
        out_shape=jax.ShapeDtypeStruct((n_pad, d_pad), jnp.float32),
        grid=(n_pad // tm, nk),
        in_specs=[
            pl.BlockSpec((tm, tk), lambda i, k: (i, k)),       # P tiles (streamed)
            pl.BlockSpec((tk, d_pad), lambda i, k: (k, 0)),    # bf16 x column tile
            pl.BlockSpec((tm, d_pad), lambda i, k: (i, 0)),    # f32 x row tile
        ],
        out_specs=pl.BlockSpec((tm, d_pad), lambda i, k: (i, 0)),
        scratch_shapes=[pltpu.VMEM((tm, d_pad), jnp.float32)],
        compiler_params=pltpu.CompilerParams(
            dimension_semantics=("parallel", "arbitrary"),
            vmem_limit_bytes=vmem_limit_bytes,
        ),
    )


@functools.partial(
    jax.jit,
    static_argnames=("dim_attributes", "num_wl_iterations", "step", "force_streamed"))
def wwl_encoder_forward(x_full: jnp.ndarray,
                        edge_index: jnp.ndarray,
                        *,
                        dim_attributes: int,
                        num_wl_iterations: int,
                        step: int = 1,
                        force_streamed: bool = False) -> jnp.ndarray:
    """Mirrors WWL_Encoder.forward(data) with data.x = x_full, data.edge_index = edge_index."""
    x0 = x_full[:, :dim_attributes].astype(jnp.float32)
    N, D = x0.shape
    d_pad = _round_up(max(D, 1), 128)          # lane-dense stores / full MXU tiles
    num_slabs = num_wl_iterations + 1

    cap = _vmem_capacity_bytes()
    vmem_limit = int(cap * 0.92)
    fused_budget = int(cap * 0.80)             # headroom for Mosaic scratch/semaphores

    # Fused (resident-P) feasibility, computed with the final padded sizes.
    n_pad_f = _round_up(max(N, 1), 256)
    fused_need = (2 * n_pad_f * n_pad_f * 2            # bf16 P: ref + in-kernel value
                  + n_pad_f * d_pad * 4                # f32 x0 input block
                  + num_slabs * n_pad_f * d_pad * 4    # f32 output slabs
                  + 4 * n_pad_f * d_pad * 4)           # f32/bf16 in-kernel temporaries
    use_fused = (not force_streamed) and (fused_need <= fused_budget)

    if use_fused:
        n_pad = n_pad_f
        P = build_propagation_matrix(edge_index, n_pad)
        x = jnp.zeros((n_pad, d_pad), jnp.float32).at[:N, :D].set(x0)
        slabs = make_fused_kernel(n_pad, d_pad, num_wl_iterations, step,
                                  vmem_limit)(P, x)
        # (K+1, n_pad, d_pad) -> [N, (K+1)*D]  (single slice/reshape at the end)
        out = jnp.transpose(slabs[:, :N, :D], (1, 0, 2))
        return out.reshape(N, num_slabs * D)

    # Large-graph fallback: P streamed per hop with MXU-aligned (512) tiles and a
    # column-reduction axis, so the working set is independent of N.
    tile = 512
    n_pad = _round_up(max(N, 1), tile)
    P = build_propagation_matrix(edge_index, n_pad)
    x = jnp.zeros((n_pad, d_pad), jnp.float32).at[:N, :D].set(x0)
    hop = make_streamed_hop_kernel(n_pad, d_pad, tile, tile, vmem_limit)

    feats = [x]
    for _ in range(num_wl_iterations):
        for _ in range(step):
            # x -> bf16 cast hoisted out of the kernel (done once per hop).
            x = hop(P, x.astype(jnp.bfloat16), x)
        feats.append(x)
    return jnp.concatenate([f[:N, :D] for f in feats], axis=-1)


def _reference(x_full, edge_index, dim_attributes, num_wl_iterations, step=1):
    """Pure-JAX f32 reference for a sanity check."""
    x = x_full[:, :dim_attributes].astype(jnp.float32)
    N = x.shape[0]
    src, dst = edge_index[0], edge_index[1]
    A = jnp.zeros((N, N), jnp.float32).at[dst, src].add(1.0)
    P = A / jnp.maximum(A.sum(axis=1, keepdims=True), 1.0)
    feats = [x]
    for _ in range(num_wl_iterations):
        for _ in range(step):
            x = 0.5 * (x + P @ x)
        feats.append(x)
    return jnp.concatenate(feats, axis=-1)


if __name__ == "__main__":
    key = jax.random.PRNGKey(0)
    k_x, k_e, k_x2, k_e2 = jax.random.split(key, 4)

    raw_dim = 12
    dim_attributes = 8

    # --- Test 1: small graph -> fused (VMEM-resident P) path -------------------
    N, K, step, num_edges = 16, 3, 1, 40
    x_full = jax.random.normal(k_x, (N, raw_dim), dtype=jnp.float32)
    edge_index = jax.random.randint(k_e, (2, num_edges), 0, N, dtype=jnp.int32)

    out = wwl_encoder_forward(x_full, edge_index, dim_attributes=dim_attributes,
                              num_wl_iterations=K, step=step)
    out = jax.block_until_ready(out)
    ref = _reference(x_full, edge_index, dim_attributes, K, step)
    assert out.shape == (N, (K + 1) * dim_attributes), out.shape
    # Only P is bf16 (x / self term / accumulation stay f32) -> tight tolerance.
    assert jnp.allclose(out, ref, atol=2e-2, rtol=2e-2), \
        float(jnp.max(jnp.abs(out - ref)))

    # --- Test 2: exercise the streamed / K-tiled large-graph fallback ----------
    N2, K2, num_edges2 = 600, 2, 3000
    x_full2 = jax.random.normal(k_x2, (N2, raw_dim), dtype=jnp.float32)
    edge_index2 = jax.random.randint(k_e2, (2, num_edges2), 0, N2, dtype=jnp.int32)

    out2 = wwl_encoder_forward(x_full2, edge_index2, dim_attributes=dim_attributes,
                               num_wl_iterations=K2, step=step, force_streamed=True)
    out2 = jax.block_until_ready(out2)
    ref2 = _reference(x_full2, edge_index2, dim_attributes, K2, step)
    assert out2.shape == (N2, (K2 + 1) * dim_attributes), out2.shape
    assert jnp.allclose(out2, ref2, atol=2e-2, rtol=2e-2), \
        float(jnp.max(jnp.abs(out2 - ref2)))

    print("KERNEL_OK")
</pallas_src>

<mosaic_0001>
module attributes {stable_mosaic.version = 11 : i64} {
  func.func @kernel(%arg0: memref<256x256xbf16, #tpu.memory_space<vmem>>, %arg1: memref<256x128xf32, #tpu.memory_space<vmem>>, %arg2: memref<4x256x128xf32, #tpu.memory_space<vmem>>) attributes {dimension_semantics = [], scalar_prefetch = 0 : i64, scratch_operands = 0 : i64, tpu.core_type = #tpu.core_type<tc>} {
    %c0 = arith.constant 0 : index
    %c0_0 = arith.constant 0 : index
    %0 = vector.load %arg1[%c0, %c0_0] : memref<256x128xf32, #tpu.memory_space<vmem>>, vector<256x128xf32>
    %c0_1 = arith.constant 0 : index
    %c0_2 = arith.constant 0 : index
    %c0_3 = arith.constant 0 : index
    %1 = vector.load %arg2[%c0_1, %c0_2, %c0_3] : memref<4x256x128xf32, #tpu.memory_space<vmem>>, vector<1x256x128xf32>
    %2 = vector.shape_cast %1 : vector<1x256x128xf32> to vector<256x128xf32>
    %3 = vector.shape_cast %0 : vector<256x128xf32> to vector<1x256x128xf32>
    tpu.vector_store %arg2[%c0_1, %c0_2, %c0_3], %3 {strides = array<i32>} : memref<4x256x128xf32, #tpu.memory_space<vmem>>, vector<1x256x128xf32>,
    %c0_4 = arith.constant 0 : index
    %c0_5 = arith.constant 0 : index
    %4 = vector.load %arg0[%c0_4, %c0_5] : memref<256x256xbf16, #tpu.memory_space<vmem>>, vector<256x256xbf16>
    %5 = arith.truncf %0 : vector<256x128xf32> to vector<256x128xbf16>
    %cst = arith.constant dense<0.000000e+00> : vector<256x128xf32>
    %6 = tpu.matmul %4, %5, %cst {dimension_numbers = #tpu.dot_dimension_numbers<[1], [0], [0], [1], [0, 0, 1, 1], [], []>} : vector<256x256xbf16>, vector<256x128xbf16>, vector<256x128xf32> -> vector<256x128xf32>
    %7 = arith.addf %0, %6 : vector<256x128xf32>
    %cst_6 = arith.constant 5.000000e-01 : f32
    %8 = vector.broadcast %cst_6 : f32 to vector<256x128xf32>
    %9 = arith.mulf %8, %7 : vector<256x128xf32>
    %c1 = arith.constant 1 : index
    %c0_7 = arith.constant 0 : index
    %c0_8 = arith.constant 0 : index
    %10 = vector.load %arg2[%c1, %c0_7, %c0_8] : memref<4x256x128xf32, #tpu.memory_space<vmem>>, vector<1x256x128xf32>
    %11 = vector.shape_cast %10 : vector<1x256x128xf32> to vector<256x128xf32>
    %12 = vector.shape_cast %9 : vector<256x128xf32> to vector<1x256x128xf32>
    tpu.vector_store %arg2[%c1, %c0_7, %c0_8], %12 {strides = array<i32>} : memref<4x256x128xf32, #tpu.memory_space<vmem>>, vector<1x256x128xf32>,
    %c0_9 = arith.constant 0 : index
    %c0_10 = arith.constant 0 : index
    %13 = vector.load %arg0[%c0_9, %c0_10] : memref<256x256xbf16, #tpu.memory_space<vmem>>, vector<256x256xbf16>
    %14 = arith.truncf %9 : vector<256x128xf32> to vector<256x128xbf16>
    %cst_11 = arith.constant dense<0.000000e+00> : vector<256x128xf32>
    %15 = tpu.matmul %13, %14, %cst_11 {dimension_numbers = #tpu.dot_dimension_numbers<[1], [0], [0], [1], [0, 0, 1, 1], [], []>} : vector<256x256xbf16>, vector<256x128xbf16>, vector<256x128xf32> -> vector<256x128xf32>
    %16 = arith.addf %9, %15 : vector<256x128xf32>
    %cst_12 = arith.constant 5.000000e-01 : f32
    %17 = vector.broadcast %cst_12 : f32 to vector<256x128xf32>
    %18 = arith.mulf %17, %16 : vector<256x128xf32>
    %c2 = arith.constant 2 : index
    %c0_13 = arith.constant 0 : index
    %c0_14 = arith.constant 0 : index
    %19 = vector.load %arg2[%c2, %c0_13, %c0_14] : memref<4x256x128xf32, #tpu.memory_space<vmem>>, vector<1x256x128xf32>
    %20 = vector.shape_cast %19 : vector<1x256x128xf32> to vector<256x128xf32>
    %21 = vector.shape_cast %18 : vector<256x128xf32> to vector<1x256x128xf32>
    tpu.vector_store %arg2[%c2, %c0_13, %c0_14], %21 {strides = array<i32>} : memref<4x256x128xf32, #tpu.memory_space<vmem>>, vector<1x256x128xf32>,
    %c0_15 = arith.constant 0 : index
    %c0_16 = arith.constant 0 : index
    %22 = vector.load %arg0[%c0_15, %c0_16] : memref<256x256xbf16, #tpu.memory_space<vmem>>, vector<256x256xbf16>
    %23 = arith.truncf %18 : vector<256x128xf32> to vector<256x128xbf16>
    %cst_17 = arith.constant dense<0.000000e+00> : vector<256x128xf32>
    %24 = tpu.matmul %22, %23, %cst_17 {dimension_numbers = #tpu.dot_dimension_numbers<[1], [0], [0], [1], [0, 0, 1, 1], [], []>} : vector<256x256xbf16>, vector<256x128xbf16>, vector<256x128xf32> -> vector<256x128xf32>
    %25 = arith.addf %18, %24 : vector<256x128xf32>
    %cst_18 = arith.constant 5.000000e-01 : f32
    %26 = vector.broadcast %cst_18 : f32 to vector<256x128xf32>
    %27 = arith.mulf %26, %25 : vector<256x128xf32>
    %c3 = arith.constant 3 : index
    %c0_19 = arith.constant 0 : index
    %c0_20 = arith.constant 0 : index
    %28 = vector.load %arg2[%c3, %c0_19, %c0_20] : memref<4x256x128xf32, #tpu.memory_space<vmem>>, vector<1x256x128xf32>
    %29 = vector.shape_cast %28 : vector<1x256x128xf32> to vector<256x128xf32>
    %30 = vector.shape_cast %27 : vector<256x128xf32> to vector<1x256x128xf32>
    tpu.vector_store %arg2[%c3, %c0_19, %c0_20], %30 {strides = array<i32>} : memref<4x256x128xf32, #tpu.memory_space<vmem>>, vector<1x256x128xf32>,
    return
  }
}

</mosaic_0001>

<llo_original>
// kernel: wwl_encoder_forward.1
$region0: #{wwl_encoder_forward.1}
  #allocation0 [shape = 'u32[]', space=smem, size = 0x4, offset = 0x4, fixed_abs, tag = 'smem constant byte address 0x4 - core index']
  #allocation1 [shape = 'u32[144,128]{1,0:T(1,128)}', space=vmem, size = 0x12000, scoped, tag = 'internal scratch']
  %s0 = inlined_call_operand.hbm [shape: bf16[256,256], index: 0, kind: input, shape index: {}]
  %s1 = inlined_call_operand.hbm [shape: f32[256,128], index: 1, kind: input, shape index: {}]
  %s2 = inlined_call_operand.hbm [shape: f32[4,256,128], index: 2, kind: output, shape index: {}]
  %s3 = sld [smem:[#allocation0]]
  $region26: #{wwl_encoder_forward.1} parent=0
    _
  %s5 = ssub.s32 1, %s3
  %s6 = scalar_select 0, %s5, %s3
  $region1: #{wwl_encoder_forward.1} parent=0
    #allocation2 [shape = 'u8[131072]{0}', space=vmem, size = 0x20000, scoped, tag = 'input window, operand 0, single buffered']
    #allocation3 [shape = 's32[1]{0}', space=sflag, size = 0x4, scoped, tag = 'scoped memory for wwl_encoder_forward.1']
    #allocation4 [shape = 's32[1]{0}', space=sflag, size = 0x4, scoped, tag = 'scoped memory for wwl_encoder_forward.1']
    #allocation5 [shape = 'u8[131072]{0}', space=vmem, size = 0x20000, scoped, tag = 'input window, operand 1, single buffered']
    #allocation6 [shape = 's32[1]{0}', space=sflag, size = 0x4, scoped, tag = 'scoped memory for wwl_encoder_forward.1']
    #allocation7 [shape = 'u8[524288]{0}', space=vmem, size = 0x80000, scoped, tag = 'output window, operand 0, single buffered']
    %7 = vsyncpa [#allocation3], 0
    %8 = vsyncpa [#allocation6], 0
    %9 = vsyncpa [#allocation4], 0
    // Predicated region
    $region2: #{wwl_encoder_forward.1} parent=1 // pred_check
      _
    $region3: #{wwl_encoder_forward.1} parent=1 // pred_check_branch
      %11 = sbr.rel (0) target = $region5
    $region4: #{wwl_encoder_forward.1} parent=1 // pred_region
      %s13 = ssub.s32 4096, 4096
      %14 = vsyncadd [#allocation3], %s13
      %s15 = sshll.u32 [#allocation2], 4
      %s16 = int_to_ptr.vmem [resolvable:$true] %s15
      %21 = dma.hbm_to_vmem [thread:$0]  %s0, 4096, %s16, [#allocation3], 128, 128, 8
    $region5: #{wwl_encoder_forward.1} parent=1 // pred_fallthru
      _
    // Predicated region
    $region6: #{wwl_encoder_forward.1} parent=1 // pred_check
      _
    $region7: #{wwl_encoder_forward.1} parent=1 // pred_check_branch
      %23 = sbr.rel (0) target = $region9
    $region8: #{wwl_encoder_forward.1} parent=1 // pred_region
      %s25 = ssub.s32 4096, 4096
      %26 = vsyncadd [#allocation6], %s25
      %s27 = sshll.u32 [#allocation5], 4
      %s28 = int_to_ptr.vmem [resolvable:$true] %s27
      %33 = dma.hbm_to_vmem [thread:$0]  %s1, 4096, %s28, [#allocation6], 128, 128, 8
    $region9: #{wwl_encoder_forward.1} parent=1 // pred_fallthru
      _
    // Predicated region
    $region10: #{wwl_encoder_forward.1} parent=1 // pred_check
      _
    $region11: #{wwl_encoder_forward.1} parent=1 // pred_check_branch
      %35 = sbr.rel (0) target = $region13
    $region12: #{wwl_encoder_forward.1} parent=1 // pred_region
      %36 = dma.done [#allocation3], 4096
    $region13: #{wwl_encoder_forward.1} parent=1 // pred_fallthru
      _
    // Predicated region
    $region14: #{wwl_encoder_forward.1} parent=1 // pred_check
      _
    $region15: #{wwl_encoder_forward.1} parent=1 // pred_check_branch
      %38 = sbr.rel (0) target = $region17
    $region16: #{wwl_encoder_forward.1} parent=1 // pred_region
      %39 = dma.done [#allocation6], 4096
    $region17: #{wwl_encoder_forward.1} parent=1 // pred_fallthru
      _
    %v41 = vld [vmem:[#allocation5] sm:$0xff]
    %v42 = vld [vmem:[#allocation5 + $0x8] sm:$0xff]
    %v43 = vld [vmem:[#allocation5 + $0x10] sm:$0xff]
    %v44 = vld [vmem:[#allocation5 + $0x18] sm:$0xff]
    %v45 = vld [vmem:[#allocation5 + $0x20] sm:$0xff]
    %v46 = vld [vmem:[#allocation5 + $0x28] sm:$0xff]
    %v47 = vld [vmem:[#allocation5 + $0x30] sm:$0xff]
    %v48 = vld [vmem:[#allocation5 + $0x38] sm:$0xff]
    %v49 = vld [vmem:[#allocation5 + $0x40] sm:$0xff]
    %v50 = vld [vmem:[#allocation5 + $0x48] sm:$0xff]
    %v51 = vld [vmem:[#allocation5 + $0x50] sm:$0xff]
    %v52 = vld [vmem:[#allocation5 + $0x58] sm:$0xff]
    %v53 = vld [vmem:[#allocation5 + $0x60] sm:$0xff]
    %v54 = vld [vmem:[#allocation5 + $0x68] sm:$0xff]
    %v55 = vld [vmem:[#allocation5 + $0x70] sm:$0xff]
    %v56 = vld [vmem:[#allocation5 + $0x78] sm:$0xff]
    %v57 = vld [vmem:[#allocation5 + $0x80] sm:$0xff]
    %v58 = vld [vmem:[#allocation5 + $0x88] sm:$0xff]
    %v59 = vld [vmem:[#allocation5 + $0x90] sm:$0xff]
    %v60 = vld [vmem:[#allocation5 + $0x98] sm:$0xff]
    %v61 = vld [vmem:[#allocation5 + $0xa0] sm:$0xff]
    %v62 = vld [vmem:[#allocation5 + $0xa8] sm:$0xff]
    %v63 = vld [vmem:[#allocation5 + $0xb0] sm:$0xff]
    %v64 = vld [vmem:[#allocation5 + $0xb8] sm:$0xff]
    %v65 = vld [vmem:[#allocation5 + $0xc0] sm:$0xff]
    %v66 = vld [vmem:[#allocation5 + $0xc8] sm:$0xff]
    %v67 = vld [vmem:[#allocation5 + $0xd0] sm:$0xff]
    %v68 = vld [vmem:[#allocation5 + $0xd8] sm:$0xff]
    %v69 = vld [vmem:[#allocation5 + $0xe0] sm:$0xff]
    %v70 = vld [vmem:[#allocation5 + $0xe8] sm:$0xff]
    %v71 = vld [vmem:[#allocation5 + $0xf0] sm:$0xff]
    %v72 = vld [vmem:[#allocation5 + $0xf8] sm:$0xff]
    %73 = vst [vmem:[#allocation7] sm:$0xff] %v41
    %74 = vst [vmem:[#allocation7 + $0x8] sm:$0xff] %v42
    %75 = vst [vmem:[#allocation7 + $0x10] sm:$0xff] %v43
    %76 = vst [vmem:[#allocation7 + $0x18] sm:$0xff] %v44
    %77 = vst [vmem:[#allocation7 + $0x20] sm:$0xff] %v45
    %78 = vst [vmem:[#allocation7 + $0x28] sm:$0xff] %v46
    %79 = vst [vmem:[#allocation7 + $0x30] sm:$0xff] %v47
    %80 = vst [vmem:[#allocation7 + $0x38] sm:$0xff] %v48
    %81 = vst [vmem:[#allocation7 + $0x40] sm:$0xff] %v49
    %82 = vst [vmem:[#allocation7 + $0x48] sm:$0xff] %v50
    %83 = vst [vmem:[#allocation7 + $0x50] sm:$0xff] %v51
    %84 = vst [vmem:[#allocation7 + $0x58] sm:$0xff] %v52
    %85 = vst [vmem:[#allocation7 + $0x60] sm:$0xff] %v53
    %86 = vst [vmem:[#allocation7 + $0x68] sm:$0xff] %v54
    %87 = vst [vmem:[#allocation7 + $0x70] sm:$0xff] %v55
    %88 = vst [vmem:[#allocation7 + $0x78] sm:$0xff] %v56
    %89 = vst [vmem:[#allocation7 + $0x80] sm:$0xff] %v57
    %90 = vst [vmem:[#allocation7 + $0x88] sm:$0xff] %v58
    %91 = vst [vmem:[#allocation7 + $0x90] sm:$0xff] %v59
    %92 = vst [vmem:[#allocation7 + $0x98] sm:$0xff] %v60
    %93 = vst [vmem:[#allocation7 + $0xa0] sm:$0xff] %v61
    %94 = vst [vmem:[#allocation7 + $0xa8] sm:$0xff] %v62
    %95 = vst [vmem:[#allocation7 + $0xb0] sm:$0xff] %v63
    %96 = vst [vmem:[#allocation7 + $0xb8] sm:$0xff] %v64
    %97 = vst [vmem:[#allocation7 + $0xc0] sm:$0xff] %v65
    %98 = vst [vmem:[#allocation7 + $0xc8] sm:$0xff] %v66
    %99 = vst [vmem:[#allocation7 + $0xd0] sm:$0xff] %v67
    %100 = vst [vmem:[#allocation7 + $0xd8] sm:$0xff] %v68
    %101 = vst [vmem:[#allocation7 + $0xe0] sm:$0xff] %v69
    %102 = vst [vmem:[#allocation7 + $0xe8] sm:$0xff] %v70
    %103 = vst [vmem:[#allocation7 + $0xf0] sm:$0xff] %v71
    %104 = vst [vmem:[#allocation7 + $0xf8] sm:$0xff] %v72
    %v105 = vld [vmem:[#allocation2] sm:$0xff]
    %v106 = vld [vmem:[#allocation2 + $0x8] sm:$0xff]
    %v107 = vld [vmem:[#allocation2 + $0x10] sm:$0xff]
    %v108 = vld [vmem:[#allocation2 + $0x18] sm:$0xff]
    %v109 = vld [vmem:[#allocation2 + $0x20] sm:$0xff]
    %v110 = vld [vmem:[#allocation2 + $0x28] sm:$0xff]
    %v111 = vld [vmem:[#allocation2 + $0x30] sm:$0xff]
    %v112 = vld [vmem:[#allocation2 + $0x38] sm:$0xff]
    %v113 = vld [vmem:[#allocation2 + $0x40] sm:$0xff]
    %v114 = vld [vmem:[#allocation2 + $0x48] sm:$0xff]
    %v115 = vld [vmem:[#allocation2 + $0x50] sm:$0xff]
    %v116 = vld [vmem:[#allocation2 + $0x58] sm:$0xff]
    %v117 = vld [vmem:[#allocation2 + $0x60] sm:$0xff]
    %v118 = vld [vmem:[#allocation2 + $0x68] sm:$0xff]
    %v119 = vld [vmem:[#allocation2 + $0x70] sm:$0xff]
    %v120 = vld [vmem:[#allocation2 + $0x78] sm:$0xff]
    %v121 = vld [vmem:[#allocation2 + $0x80] sm:$0xff]
    %v122 = vld [vmem:[#allocation2 + $0x88] sm:$0xff]
    %v123 = vld [vmem:[#allocation2 + $0x90] sm:$0xff]
    %v124 = vld [vmem:[#allocation2 + $0x98] sm:$0xff]
    %v125 = vld [vmem:[#allocation2 + $0xa0] sm:$0xff]
    %v126 = vld [vmem:[#allocation2 + $0xa8] sm:$0xff]
    %v127 = vld [vmem:[#allocation2 + $0xb0] sm:$0xff]
    %v128 = vld [vmem:[#allocation2 + $0xb8] sm:$0xff]
    %v129 = vld [vmem:[#allocation2 + $0xc0] sm:$0xff]
    %v130 = vld [vmem:[#allocation2 + $0xc8] sm:$0xff]
    %v131 = vld [vmem:[#allocation2 + $0xd0] sm:$0xff]
    %v132 = vld [vmem:[#allocation2 + $0xd8] sm:$0xff]
    %v133 = vld [vmem:[#allocation2 + $0xe0] sm:$0xff]
    %v134 = vld [vmem:[#allocation2 + $0xe8] sm:$0xff]
    %v135 = vld [vmem:[#allocation2 + $0xf0] sm:$0xff]
    %v136 = vld [vmem:[#allocation2 + $0xf8] sm:$0xff]
    %v137 = vpack.c.bf16 %v42, %v41
    %v138 = vpack.c.bf16 %v44, %v43
    %v139 = vpack.c.bf16 %v46, %v45
    %v140 = vpack.c.bf16 %v48, %v47
    %v141 = vpack.c.bf16 %v50, %v49
    %v142 = vpack.c.bf16 %v52, %v51
    %v143 = vpack.c.bf16 %v54, %v53
    %v144 = vpack.c.bf16 %v56, %v55
    %v145 = vpack.c.bf16 %v58, %v57
    %v146 = vpack.c.bf16 %v60, %v59
    %v147 = vpack.c.bf16 %v62, %v61
    %v148 = vpack.c.bf16 %v64, %v63
    %v149 = vpack.c.bf16 %v66, %v65
    %v150 = vpack.c.bf16 %v68, %v67
    %v151 = vpack.c.bf16 %v70, %v69
    %v152 = vpack.c.bf16 %v72, %v71
    %v185 = vunpack.c.l.b16 %v105
    %v186 = vunpack.c.h.b16 %v105
    %v187 = vunpack.c.l.b16 %v106
    %v188 = vunpack.c.h.b16 %v106
    %v189 = vunpack.c.l.b16 %v107
    %v190 = vunpack.c.h.b16 %v107
    %v191 = vunpack.c.l.b16 %v108
    %v192 = vunpack.c.h.b16 %v108
    %v193 = vunpack.c.l.b16 %v109
    %v194 = vunpack.c.h.b16 %v109
    %v195 = vunpack.c.l.b16 %v110
    %v196 = vunpack.c.h.b16 %v110
    %v197 = vunpack.c.l.b16 %v111
    %v198 = vunpack.c.h.b16 %v111
    %v199 = vunpack.c.l.b16 %v112
    %v200 = vunpack.c.h.b16 %v112
    %v201 = vunpack.c.l.b16 %v113
    %v202 = vunpack.c.h.b16 %v113
    %v203 = vunpack.c.l.b16 %v114
    %v204 = vunpack.c.h.b16 %v114
    %v205 = vunpack.c.l.b16 %v115
    %v206 = vunpack.c.h.b16 %v115
    %v207 = vunpack.c.l.b16 %v116
    %v208 = vunpack.c.h.b16 %v116
    %v209 = vunpack.c.l.b16 %v117
    %v210 = vunpack.c.h.b16 %v117
    %v211 = vunpack.c.l.b16 %v118
    %v212 = vunpack.c.h.b16 %v118
    %v213 = vunpack.c.l.b16 %v119
    %v214 = vunpack.c.h.b16 %v119
    %v215 = vunpack.c.l.b16 %v120
    %v216 = vunpack.c.h.b16 %v120
    %v217 = vunpack.c.l.b16 %v121
    %v218 = vunpack.c.h.b16 %v121
    %v219 = vunpack.c.l.b16 %v122
    %v220 = vunpack.c.h.b16 %v122
    %v221 = vunpack.c.l.b16 %v123
    %v222 = vunpack.c.h.b16 %v123
    %v223 = vunpack.c.l.b16 %v124
    %v224 = vunpack.c.h.b16 %v124
    %v225 = vunpack.c.l.b16 %v125
    %v226 = vunpack.c.h.b16 %v125
    %v227 = vunpack.c.l.b16 %v126
    %v228 = vunpack.c.h.b16 %v126
    %v229 = vunpack.c.l.b16 %v127
    %v230 = vunpack.c.h.b16 %v127
    %v231 = vunpack.c.l.b16 %v128
    %v232 = vunpack.c.h.b16 %v128
    %v233 = vunpack.c.l.b16 %v129
    %v234 = vunpack.c.h.b16 %v129
    %v235 = vunpack.c.l.b16 %v130
    %v236 = vunpack.c.h.b16 %v130
    %v237 = vunpack.c.l.b16 %v131
    %v238 = vunpack.c.h.b16 %v131
    %v239 = vunpack.c.l.b16 %v132
    %v240 = vunpack.c.h.b16 %v132
    %v241 = vunpack.c.l.b16 %v133
    %v242 = vunpack.c.h.b16 %v133
    %v243 = vunpack.c.l.b16 %v134
    %v244 = vunpack.c.h.b16 %v134
    %v245 = vunpack.c.l.b16 %v135
    %v246 = vunpack.c.h.b16 %v135
    %v247 = vunpack.c.l.b16 %v136
    %v248 = vunpack.c.h.b16 %v136
    %v249 = vpack.c.b16 %v187, %v185
    %v250 = vpack.c.b16 %v188, %v186
    %v251 = vpack.c.b16 %v191, %v189
    %v252 = vpack.c.b16 %v192, %v190
    %v253 = vpack.c.b16 %v195, %v193
    %v254 = vpack.c.b16 %v196, %v194
    %v255 = vpack.c.b16 %v199, %v197
    %v256 = vpack.c.b16 %v200, %v198
    %v257 = vpack.c.b16 %v203, %v201
    %v258 = vpack.c.b16 %v204, %v202
    %v259 = vpack.c.b16 %v207, %v205
    %v260 = vpack.c.b16 %v208, %v206
    %v261 = vpack.c.b16 %v211, %v209
    %v262 = vpack.c.b16 %v212, %v210
    %v263 = vpack.c.b16 %v215, %v213
    %v264 = vpack.c.b16 %v216, %v214
    %v265 = vpack.c.b16 %v219, %v217
    %v266 = vpack.c.b16 %v220, %v218
    %v267 = vpack.c.b16 %v223, %v221
    %v268 = vpack.c.b16 %v224, %v222
    %v269 = vpack.c.b16 %v227, %v225
    %v270 = vpack.c.b16 %v228, %v226
    %v271 = vpack.c.b16 %v231, %v229
    %v272 = vpack.c.b16 %v232, %v230
    %v273 = vpack.c.b16 %v235, %v233
    %v274 = vpack.c.b16 %v236, %v234
    %v275 = vpack.c.b16 %v239, %v237
    %v276 = vpack.c.b16 %v240, %v238
    %v277 = vpack.c.b16 %v243, %v241
    %v278 = vpack.c.b16 %v244, %v242
    %v279 = vpack.c.b16 %v247, %v245
    %v280 = vpack.c.b16 %v248, %v246
    %313 = vmatprep.subr.bf16.mxu0 0
    %314 = vmatpush1.bf16.msra.mxu0 %v137
    %315 = vmatprep.subr.bf16.mxu0 0
    %316 = vmatpush1.bf16.msra.mxu0 %v138
    %317 = vmatprep.subr.bf16.mxu0 0
    %318 = vmatpush1.bf16.msra.mxu0 %v139
    %319 = vmatprep.subr.bf16.mxu0 0
    %320 = vmatpush1.bf16.msra.mxu0 %v140
    %321 = vmatprep.subr.bf16.mxu0 0
    %322 = vmatpush1.bf16.msra.mxu0 %v141
    %323 = vmatprep.subr.bf16.mxu0 0
    %324 = vmatpush1.bf16.msra.mxu0 %v142
    %325 = vmatprep.subr.bf16.mxu0 0
    %326 = vmatpush1.bf16.msra.mxu0 %v143
    %327 = vmatprep.subr.bf16.mxu0 0
    %328 = vmatpush1.bf16.msra.mxu0 %v144
    %329 = vmatprep.subr.bf16.mxu0 0
    %330 = vmatpush1.bf16.msra.mxu0 %v145
    %331 = vmatprep.subr.bf16.mxu0 0
    %332 = vmatpush1.bf16.msra.mxu0 %v146
    %333 = vmatprep.subr.bf16.mxu0 0
    %334 = vmatpush1.bf16.msra.mxu0 %v147
    %335 = vmatprep.subr.bf16.mxu0 0
    %336 = vmatpush1.bf16.msra.mxu0 %v148
    %337 = vmatprep.subr.bf16.mxu0 0
    %338 = vmatpush1.bf16.msra.mxu0 %v149
    %339 = vmatprep.subr.bf16.mxu0 0
    %340 = vmatpush1.bf16.msra.mxu0 %v150
    %341 = vmatprep.subr.bf16.mxu0 0
    %342 = vmatpush1.bf16.msra.mxu0 %v151
    %343 = vmatprep.subr.bf16.mxu0 0
    %344 = vmatpush1.bf16.msra.mxu0 %v152
    %345 = vmatprep.mubr.bf16.mxu0 %v250
    %346 = vmatmul.mubr.bf16.gmra.mrb[0].mxu0 %v249
    %v347 = vpop.f32.mrb[0].mxu0
    %v348 = vadd.f32 0.0, %v347
    %v349 = vpop.f32.mrb[0].mxu0
    %v350 = vpop.f32.mrb[0].mxu0
    %v351 = vadd.f32 0.0, %v350
    %v352 = vpop.f32.mrb[0].mxu0
    %353 = vmatprep.mubr.bf16.mxu0 %v252
    %354 = vmatmul.mubr.bf16.gmra.mrb[0].mxu0 %v251
    %v355 = vpop.f32.mrb[0].mxu0
    %v356 = vadd.f32 0.0, %v355
    %v357 = vpop.f32.mrb[0].mxu0
    %v358 = vpop.f32.mrb[0].mxu0
    %v359 = vadd.f32 0.0, %v358
    %v360 = vpop.f32.mrb[0].mxu0
    %361 = vmatprep.mubr.bf16.mxu0 %v254
    %362 = vmatmul.mubr.bf16.gmra.mrb[0].mxu0 %v253
    %v363 = vpop.f32.mrb[0].mxu0
    %v364 = vadd.f32 0.0, %v363
    %v365 = vpop.f32.mrb[0].mxu0
    %v366 = vpop.f32.mrb[0].mxu0
    %v367 = vadd.f32 0.0, %v366
    %v368 = vpop.f32.mrb[0].mxu0
    %369 = vmatprep.mubr.bf16.mxu0 %v256
    %370 = vmatmul.mubr.bf16.gmra.mrb[0].mxu0 %v255
    %v371 = vpop.f32.mrb[0].mxu0
    %v372 = vadd.f32 0.0, %v371
    %v373 = vpop.f32.mrb[0].mxu0
    %v374 = vpop.f32.mrb[0].mxu0
    %v375 = vadd.f32 0.0, %v374
    %v376 = vpop.f32.mrb[0].mxu0
    %377 = vmatprep.mubr.bf16.mxu0 %v258
    %378 = vmatmul.mubr.bf16.gmra.mrb[0].mxu0 %v257
    %v379 = vpop.f32.mrb[0].mxu0
    %v380 = vadd.f32 0.0, %v379
    %v381 = vpop.f32.mrb[0].mxu0
    %v382 = vpop.f32.mrb[0].mxu0
    %v383 = vadd.f32 0.0, %v382
    %v384 = vpop.f32.mrb[0].mxu0
    %385 = vmatprep.mubr.bf16.mxu0 %v260
    %386 = vmatmul.mubr.bf16.gmra.mrb[0].mxu0 %v259
    %v387 = vpop.f32.mrb[0].mxu0
    %v388 = vadd.f32 0.0, %v387
    %v389 = vpop.f32.mrb[0].mxu0
    %v390 = vpop.f32.mrb[0].mxu0
    %v391 = vadd.f32 0.0, %v390
    %v392 = vpop.f32.mrb[0].mxu0
    %393 = vmatprep.mubr.bf16.mxu0 %v262
    %394 = vmatmul.mubr.bf16.gmra.mrb[0].mxu0 %v261
    %v395 = vpop.f32.mrb[0].mxu0
    %v396 = vadd.f32 0.0, %v395
    %v397 = vpop.f32.mrb[0].mxu0
    %v398 = vpop.f32.mrb[0].mxu0
    %v399 = vadd.f32 0.0, %v398
    %v400 = vpop.f32.mrb[0].mxu0
    %401 = vmatprep.mubr.bf16.mxu0 %v264
    %402 = vmatmul.mubr.bf16.gmra.mrb[0].mxu0 %v263
    %v403 = vpop.f32.mrb[0].mxu0
    %v404 = vadd.f32 0.0, %v403
    %v405 = vpop.f32.mrb[0].mxu0
    %v406 = vpop.f32.mrb[0].mxu0
    %v407 = vadd.f32 0.0, %v406
    %v408 = vpop.f32.mrb[0].mxu0
    %409 = vmatprep.mubr.bf16.mxu0 %v266
    %410 = vmatmul.mubr.bf16.gmra.mrb[0].mxu0 %v265
    %v411 = vpop.f32.mrb[0].mxu0
    %v412 = vadd.f32 0.0, %v411
    %v413 = vpop.f32.mrb[0].mxu0
    %v414 = vpop.f32.mrb[0].mxu0
    %v415 = vadd.f32 0.0, %v414
    %v416 = vpop.f32.mrb[0].mxu0
    %417 = vmatprep.mubr.bf16.mxu0 %v268
    %418 = vmatmul.mubr.bf16.gmra.mrb[0].mxu0 %v267
    %v419 = vpop.f32.mrb[0].mxu0
    %v420 = vadd.f32 0.0, %v419
    %v421 = vpop.f32.mrb[0].mxu0
    %v422 = vpop.f32.mrb[0].mxu0
    %v423 = vadd.f32 0.0, %v422
    %v424 = vpop.f32.mrb[0].mxu0
    %425 = vmatprep.mubr.bf16.mxu0 %v270
    %426 = vmatmul.mubr.bf16.gmra.mrb[0].mxu0 %v269
    %v427 = vpop.f32.mrb[0].mxu0
    %v428 = vadd.f32 0.0, %v427
    %v429 = vpop.f32.mrb[0].mxu0
    %v430 = vpop.f32.mrb[0].mxu0
    %v431 = vadd.f32 0.0, %v430
    %v432 = vpop.f32.mrb[0].mxu0
    %433 = vmatprep.mubr.bf16.mxu0 %v272
    %434 = vmatmul.mubr.bf16.gmra.mrb[0].mxu0 %v271
    %v435 = vpop.f32.mrb[0].mxu0
    %v436 = vadd.f32 0.0, %v435
    %v437 = vpop.f32.mrb[0].mxu0
    %v438 = vpop.f32.mrb[0].mxu0
    %v439 = vadd.f32 0.0, %v438
    %v440 = vpop.f32.mrb[0].mxu0
    %441 = vmatprep.mubr.bf16.mxu0 %v274
    %442 = vmatmul.mubr.bf16.gmra.mrb[0].mxu0 %v273
    %v443 = vpop.f32.mrb[0].mxu0
    %v444 = vadd.f32 0.0, %v443
    %v445 = vpop.f32.mrb[0].mxu0
    %v446 = vpop.f32.mrb[0].mxu0
    %v447 = vadd.f32 0.0, %v446
    %v448 = vpop.f32.mrb[0].mxu0
    %449 = vmatprep.mubr.bf16.mxu0 %v276
    %450 = vmatmul.mubr.bf16.gmra.mrb[0].mxu0 %v275
    %v451 = vpop.f32.mrb[0].mxu0
    %v452 = vadd.f32 0.0, %v451
    %v453 = vpop.f32.mrb[0].mxu0
    %v454 = vpop.f32.mrb[0].mxu0
    %v455 = vadd.f32 0.0, %v454
    %v456 = vpop.f32.mrb[0].mxu0
    %457 = vmatprep.mubr.bf16.mxu0 %v278
    %458 = vmatmul.mubr.bf16.gmra.mrb[0].mxu0 %v277
    %v459 = vpop.f32.mrb[0].mxu0
    %v460 = vadd.f32 0.0, %v459
    %v461 = vpop.f32.mrb[0].mxu0
    %v462 = vpop.f32.mrb[0].mxu0
    %v463 = vadd.f32 0.0, %v462
    %v464 = vpop.f32.mrb[0].mxu0
    %465 = vmatprep.mubr.bf16.mxu0 %v280
    %466 = vmatmul.mubr.bf16.gmra.mrb[0].mxu0 %v279
    %v467 = vpop.f32.mrb[0].mxu0
    %v468 = vadd.f32 0.0, %v467
    %v469 = vpop.f32.mrb[0].mxu0
    %v470 = vpop.f32.mrb[0].mxu0
    %v471 = vadd.f32 0.0, %v470
    %v472 = vpop.f32.mrb[0].mxu0
    %473 = vdwg.mxu0
    %v474 = vadd.f32 %v41, %v348
    %v475 = vadd.f32 %v42, %v351
    %v476 = vadd.f32 %v43, %v356
    %v477 = vadd.f32 %v44, %v359
    %v478 = vadd.f32 %v45, %v364
    %v479 = vadd.f32 %v46, %v367
    %v480 = vadd.f32 %v47, %v372
    %v481 = vadd.f32 %v48, %v375
    %v482 = vadd.f32 %v49, %v380
    %v483 = vadd.f32 %v50, %v383
    %v484 = vadd.f32 %v51, %v388
    %v485 = vadd.f32 %v52, %v391
    %v486 = vadd.f32 %v53, %v396
    %v487 = vadd.f32 %v54, %v399
    %v488 = vadd.f32 %v55, %v404
    %v489 = vadd.f32 %v56, %v407
    %v490 = vadd.f32 %v57, %v412
    %v491 = vadd.f32 %v58, %v415
    %v492 = vadd.f32 %v59, %v420
    %v493 = vadd.f32 %v60, %v423
    %v494 = vadd.f32 %v61, %v428
    %v495 = vadd.f32 %v62, %v431
    %v496 = vadd.f32 %v63, %v436
    %v497 = vadd.f32 %v64, %v439
    %v498 = vadd.f32 %v65, %v444
    %v499 = vadd.f32 %v66, %v447
    %v500 = vadd.f32 %v67, %v452
    %v501 = vadd.f32 %v68, %v455
    %v502 = vadd.f32 %v69, %v460
    %v503 = vadd.f32 %v70, %v463
    %v504 = vadd.f32 %v71, %v468
    %v505 = vadd.f32 %v72, %v471
    %v506 = vmul.f32 %v474, 0.5
    %v507 = vmul.f32 %v475, 0.5
    %v508 = vmul.f32 %v476, 0.5
    %v509 = vmul.f32 %v477, 0.5
    %v510 = vmul.f32 %v478, 0.5
    %v511 = vmul.f32 %v479, 0.5
    %v512 = vmul.f32 %v480, 0.5
    %v513 = vmul.f32 %v481, 0.5
    %v514 = vmul.f32 %v482, 0.5
    %v515 = vmul.f32 %v483, 0.5
    %v516 = vmul.f32 %v484, 0.5
    %v517 = vmul.f32 %v485, 0.5
    %v518 = vmul.f32 %v486, 0.5
    %v519 = vmul.f32 %v487, 0.5
    %v520 = vmul.f32 %v488, 0.5
    %v521 = vmul.f32 %v489, 0.5
    %v522 = vmul.f32 %v490, 0.5
    %v523 = vmul.f32 %v491, 0.5
    %v524 = vmul.f32 %v492, 0.5
    %v525 = vmul.f32 %v493, 0.5
    %v526 = vmul.f32 %v494, 0.5
    %v527 = vmul.f32 %v495, 0.5
    %v528 = vmul.f32 %v496, 0.5
    %v529 = vmul.f32 %v497, 0.5
    %v530 = vmul.f32 %v498, 0.5
    %v531 = vmul.f32 %v499, 0.5
    %v532 = vmul.f32 %v500, 0.5
    %v533 = vmul.f32 %v501, 0.5
    %v534 = vmul.f32 %v502, 0.5
    %v535 = vmul.f32 %v503, 0.5
    %v536 = vmul.f32 %v504, 0.5
    %v537 = vmul.f32 %v505, 0.5
    %s538 = scalar_lea.vmem [#allocation7], 256
    %539 = vst [vmem:[%s538] sm:$0xff] %v506
    %540 = vst [vmem:[%s538 + $0x8] sm:$0xff] %v507
    %541 = vst [vmem:[%s538 + $0x10] sm:$0xff] %v508
    %542 = vst [vmem:[%s538 + $0x18] sm:$0xff] %v509
    %543 = vst [vmem:[%s538 + $0x20] sm:$0xff] %v510
    %544 = vst [vmem:[%s538 + $0x28] sm:$0xff] %v511
    %545 = vst [vmem:[%s538 + $0x30] sm:$0xff] %v512
    %546 = vst [vmem:[%s538 + $0x38] sm:$0xff] %v513
    %547 = vst [vmem:[%s538 + $0x40] sm:$0xff] %v514
    %548 = vst [vmem:[%s538 + $0x48] sm:$0xff] %v515
    %549 = vst [vmem:[%s538 + $0x50] sm:$0xff] %v516
    %550 = vst [vmem:[%s538 + $0x58] sm:$0xff] %v517
    %551 = vst [vmem:[%s538 + $0x60] sm:$0xff] %v518
    %552 = vst [vmem:[%s538 + $0x68] sm:$0xff] %v519
    %553 = vst [vmem:[%s538 + $0x70] sm:$0xff] %v520
    %554 = vst [vmem:[%s538 + $0x78] sm:$0xff] %v521
    %555 = vst [vmem:[%s538 + $0x80] sm:$0xff] %v522
    %556 = vst [vmem:[%s538 + $0x88] sm:$0xff] %v523
    %557 = vst [vmem:[%s538 + $0x90] sm:$0xff] %v524
    %558 = vst [vmem:[%s538 + $0x98] sm:$0xff] %v525
    %559 = vst [vmem:[%s538 + $0xa0] sm:$0xff] %v526
    %560 = vst [vmem:[%s538 + $0xa8] sm:$0xff] %v527
    %561 = vst [vmem:[%s538 + $0xb0] sm:$0xff] %v528
    %562 = vst [vmem:[%s538 + $0xb8] sm:$0xff] %v529
    %563 = vst [vmem:[%s538 + $0xc0] sm:$0xff] %v530
    %564 = vst [vmem:[%s538 + $0xc8] sm:$0xff] %v531
    %565 = vst [vmem:[%s538 + $0xd0] sm:$0xff] %v532
    %566 = vst [vmem:[%s538 + $0xd8] sm:$0xff] %v533
    %567 = vst [vmem:[%s538 + $0xe0] sm:$0xff] %v534
    %568 = vst [vmem:[%s538 + $0xe8] sm:$0xff] %v535
    %569 = vst [vmem:[%s538 + $0xf0] sm:$0xff] %v536
    %570 = vst [vmem:[%s538 + $0xf8] sm:$0xff] %v537
    %v571 = vld [vmem:[#allocation2] sm:$0xff]
    %v572 = vld [vmem:[#allocation2 + $0x8] sm:$0xff]
    %v573 = vld [vmem:[#allocation2 + $0x10] sm:$0xff]
    %v574 = vld [vmem:[#allocation2 + $0x18] sm:$0xff]
    %v575 = vld [vmem:[#allocation2 + $0x20] sm:$0xff]
    %v576 = vld [vmem:[#allocation2 + $0x28] sm:$0xff]
    %v577 = vld [vmem:[#allocation2 + $0x30] sm:$0xff]
    %v578 = vld [vmem:[#allocation2 + $0x38] sm:$0xff]
    %v579 = vld [vmem:[#allocation2 + $0x40] sm:$0xff]
    %v580 = vld [vmem:[#allocation2 + $0x48] sm:$0xff]
    %v581 = vld [vmem:[#allocation2 + $0x50] sm:$0xff]
    %v582 = vld [vmem:[#allocation2 + $0x58] sm:$0xff]
    %v583 = vld [vmem:[#allocation2 + $0x60] sm:$0xff]
    %v584 = vld [vmem:[#allocation2 + $0x68] sm:$0xff]
    %v585 = vld [vmem:[#allocation2 + $0x70] sm:$0xff]
    %v586 = vld [vmem:[#allocation2 + $0x78] sm:$0xff]
    %v587 = vld [vmem:[#allocation2 + $0x80] sm:$0xff]
    %v588 = vld [vmem:[#allocation2 + $0x88] sm:$0xff]
    %v589 = vld [vmem:[#allocation2 + $0x90] sm:$0xff]
    %v590 = vld [vmem:[#allocation2 + $0x98] sm:$0xff]
    %v591 = vld [vmem:[#allocation2 + $0xa0] sm:$0xff]
    %v592 = vld [vmem:[#allocation2 + $0xa8] sm:$0xff]
    %v593 = vld [vmem:[#allocation2 + $0xb0] sm:$0xff]
    %v594 = vld [vmem:[#allocation2 + $0xb8] sm:$0xff]
    %v595 = vld [vmem:[#allocation2 + $0xc0] sm:$0xff]
    %v596 = vld [vmem:[#allocation2 + $0xc8] sm:$0xff]
    %v597 = vld [vmem:[#allocation2 + $0xd0] sm:$0xff]
    %v598 = vld [vmem:[#allocation2 + $0xd8] sm:$0xff]
    %v599 = vld [vmem:[#allocation2 + $0xe0] sm:$0xff]
    %v600 = vld [vmem:[#allocation2 + $0xe8] sm:$0xff]
    %v601 = vld [vmem:[#allocation2 + $0xf0] sm:$0xff]
    %v602 = vld [vmem:[#allocation2 + $0xf8] sm:$0xff]
    %v603 = vpack.c.bf16 %v507, %v506
    %v604 = vpack.c.bf16 %v509, %v508
    %v605 = vpack.c.bf16 %v511, %v510
    %v606 = vpack.c.bf16 %v513, %v512
    %v607 = vpack.c.bf16 %v515, %v514
    %v608 = vpack.c.bf16 %v517, %v516
    %v609 = vpack.c.bf16 %v519, %v518
    %v610 = vpack.c.bf16 %v521, %v520
    %v611 = vpack.c.bf16 %v523, %v522
    %v612 = vpack.c.bf16 %v525, %v524
    %v613 = vpack.c.bf16 %v527, %v526
    %v614 = vpack.c.bf16 %v529, %v528
    %v615 = vpack.c.bf16 %v531, %v530
    %v616 = vpack.c.bf16 %v533, %v532
    %v617 = vpack.c.bf16 %v535, %v534
    %v618 = vpack.c.bf16 %v537, %v536
    %v651 = vunpack.c.l.b16 %v571
    %v652 = vunpack.c.h.b16 %v571
    %v653 = vunpack.c.l.b16 %v572
    %v654 = vunpack.c.h.b16 %v572
    %v655 = vunpack.c.l.b16 %v573
    %v656 = vunpack.c.h.b16 %v573
    %v657 = vunpack.c.l.b16 %v574
    %v658 = vunpack.c.h.b16 %v574
    %v659 = vunpack.c.l.b16 %v575
    %v660 = vunpack.c.h.b16 %v575
    %v661 = vunpack.c.l.b16 %v576
    %v662 = vunpack.c.h.b16 %v576
    %v663 = vunpack.c.l.b16 %v577
    %v664 = vunpack.c.h.b16 %v577
    %v665 = vunpack.c.l.b16 %v578
    %v666 = vunpack.c.h.b16 %v578
    %v667 = vunpack.c.l.b16 %v579
    %v668 = vunpack.c.h.b16 %v579
    %v669 = vunpack.c.l.b16 %v580
    %v670 = vunpack.c.h.b16 %v580
    %v671 = vunpack.c.l.b16 %v581
    %v672 = vunpack.c.h.b16 %v581
    %v673 = vunpack.c.l.b16 %v582
    %v674 = vunpack.c.h.b16 %v582
    %v675 = vunpack.c.l.b16 %v583
    %v676 = vunpack.c.h.b16 %v583
    %v677 = vunpack.c.l.b16 %v584
    %v678 = vunpack.c.h.b16 %v584
    %v679 = vunpack.c.l.b16 %v585
    %v680 = vunpack.c.h.b16 %v585
    %v681 = vunpack.c.l.b16 %v586
    %v682 = vunpack.c.h.b16 %v586
    %v683 = vunpack.c.l.b16 %v587
    %v684 = vunpack.c.h.b16 %v587
    %v685 = vunpack.c.l.b16 %v588
    %v686 = vunpack.c.h.b16 %v588
    %v687 = vunpack.c.l.b16 %v589
    %v688 = vunpack.c.h.b16 %v589
    %v689 = vunpack.c.l.b16 %v590
    %v690 = vunpack.c.h.b16 %v590
    %v691 = vunpack.c.l.b16 %v591
    %v692 = vunpack.c.h.b16 %v591
    %v693 = vunpack.c.l.b16 %v592
    %v694 = vunpack.c.h.b16 %v592
    %v695 = vunpack.c.l.b16 %v593
    %v696 = vunpack.c.h.b16 %v593
    %v697 = vunpack.c.l.b16 %v594
    %v698 = vunpack.c.h.b16 %v594
    %v699 = vunpack.c.l.b16 %v595
    %v700 = vunpack.c.h.b16 %v595
    %v701 = vunpack.c.l.b16 %v596
    %v702 = vunpack.c.h.b16 %v596
    %v703 = vunpack.c.l.b16 %v597
    %v704 = vunpack.c.h.b16 %v597
    %v705 = vunpack.c.l.b16 %v598
    %v706 = vunpack.c.h.b16 %v598
    %v707 = vunpack.c.l.b16 %v599
    %v708 = vunpack.c.h.b16 %v599
    %v709 = vunpack.c.l.b16 %v600
    %v710 = vunpack.c.h.b16 %v600
    %v711 = vunpack.c.l.b16 %v601
    %v712 = vunpack.c.h.b16 %v601
    %v713 = vunpack.c.l.b16 %v602
    %v714 = vunpack.c.h.b16 %v602
    %v715 = vpack.c.b16 %v653, %v651
    %v716 = vpack.c.b16 %v654, %v652
    %v717 = vpack.c.b16 %v657, %v655
    %v718 = vpack.c.b16 %v658, %v656
    %v719 = vpack.c.b16 %v661, %v659
    %v720 = vpack.c.b16 %v662, %v660
    %v721 = vpack.c.b16 %v665, %v663
    %v722 = vpack.c.b16 %v666, %v664
    %v723 = vpack.c.b16 %v669, %v667
    %v724 = vpack.c.b16 %v670, %v668
    %v725 = vpack.c.b16 %v673, %v671
    %v726 = vpack.c.b16 %v674, %v672
    %v727 = vpack.c.b16 %v677, %v675
    %v728 = vpack.c.b16 %v678, %v676
    %v729 = vpack.c.b16 %v681, %v679
    %v730 = vpack.c.b16 %v682, %v680
    %v731 = vpack.c.b16 %v685, %v683
    %v732 = vpack.c.b16 %v686, %v684
    %v733 = vpack.c.b16 %v689, %v687
    %v734 = vpack.c.b16 %v690, %v688
    %v735 = vpack.c.b16 %v693, %v691
    %v736 = vpack.c.b16 %v694, %v692
    %v737 = vpack.c.b16 %v697, %v695
    %v738 = vpack.c.b16 %v698, %v696
    %v739 = vpack.c.b16 %v701, %v699
    %v740 = vpack.c.b16 %v702, %v700
    %v741 = vpack.c.b16 %v705, %v703
    %v742 = vpack.c.b16 %v706, %v704
    %v743 = vpack.c.b16 %v709, %v707
    %v744 = vpack.c.b16 %v710, %v708
    %v745 = vpack.c.b16 %v713, %v711
    %v746 = vpack.c.b16 %v714, %v712
    %779 = vmatprep.subr.bf16.mxu0 0
    %780 = vmatpush1.bf16.msra.mxu0 %v603
    %781 = vmatprep.subr.bf16.mxu0 0
    %782 = vmatpush1.bf16.msra.mxu0 %v604
    %783 = vmatprep.subr.bf16.mxu0 0
    %784 = vmatpush1.bf16.msra.mxu0 %v605
    %785 = vmatprep.subr.bf16.mxu0 0
    %786 = vmatpush1.bf16.msra.mxu0 %v606
    %787 = vmatprep.subr.bf16.mxu0 0
    %788 = vmatpush1.bf16.msra.mxu0 %v607
    %789 = vmatprep.subr.bf16.mxu0 0
    %790 = vmatpush1.bf16.msra.mxu0 %v608
    %791 = vmatprep.subr.bf16.mxu0 0
    %792 = vmatpush1.bf16.msra.mxu0 %v609
    %793 = vmatprep.subr.bf16.mxu0 0
    %794 = vmatpush1.bf16.msra.mxu0 %v610
    %795 = vmatprep.subr.bf16.mxu0 0
    %796 = vmatpush1.bf16.msra.mxu0 %v611
    %797 = vmatprep.subr.bf16.mxu0 0
    %798 = vmatpush1.bf16.msra.mxu0 %v612
    %799 = vmatprep.subr.bf16.mxu0 0
    %800 = vmatpush1.bf16.msra.mxu0 %v613
    %801 = vmatprep.subr.bf16.mxu0 0
    %802 = vmatpush1.bf16.msra.mxu0 %v614
    %803 = vmatprep.subr.bf16.mxu0 0
    %804 = vmatpush1.bf16.msra.mxu0 %v615
    %805 = vmatprep.subr.bf16.mxu0 0
    %806 = vmatpush1.bf16.msra.mxu0 %v616
    %807 = vmatprep.subr.bf16.mxu0 0
    %808 = vmatpush1.bf16.msra.mxu0 %v617
    %809 = vmatprep.subr.bf16.mxu0 0
    %810 = vmatpush1.bf16.msra.mxu0 %v618
    %811 = vmatprep.mubr.bf16.mxu0 %v716
    %812 = vmatmul.mubr.bf16.gmra.mrb[0].mxu0 %v715
    %v813 = vpop.f32.mrb[0].mxu0
    %v814 = vadd.f32 0.0, %v813
    %v815 = vpop.f32.mrb[0].mxu0
    %v816 = vpop.f32.mrb[0].mxu0
    %v817 = vadd.f32 0.0, %v816
    %v818 = vpop.f32.mrb[0].mxu0
    %819 = vmatprep.mubr.bf16.mxu0 %v718
    %820 = vmatmul.mubr.bf16.gmra.mrb[0].mxu0 %v717
    %v821 = vpop.f32.mrb[0].mxu0
    %v822 = vadd.f32 0.0, %v821
    %v823 = vpop.f32.mrb[0].mxu0
    %v824 = vpop.f32.mrb[0].mxu0
    %v825 = vadd.f32 0.0, %v824
    %v826 = vpop.f32.mrb[0].mxu0
    %827 = vmatprep.mubr.bf16.mxu0 %v720
    %828 = vmatmul.mubr.bf16.gmra.mrb[0].mxu0 %v719
    %v829 = vpop.f32.mrb[0].mxu0
    %v830 = vadd.f32 0.0, %v829
    %v831 = vpop.f32.mrb[0].mxu0
    %v832 = vpop.f32.mrb[0].mxu0
    %v833 = vadd.f32 0.0, %v832
    %v834 = vpop.f32.mrb[0].mxu0
    %835 = vmatprep.mubr.bf16.mxu0 %v722
    %836 = vmatmul.mubr.bf16.gmra.mrb[0].mxu0 %v721
    %v837 = vpop.f32.mrb[0].mxu0
    %v838 = vadd.f32 0.0, %v837
    %v839 = vpop.f32.mrb[0].mxu0
    %v840 = vpop.f32.mrb[0].mxu0
    %v841 = vadd.f32 0.0, %v840
    %v842 = vpop.f32.mrb[0].mxu0
    %843 = vmatprep.mubr.bf16.mxu0 %v724
    %844 = vmatmul.mubr.bf16.gmra.mrb[0].mxu0 %v723
    %v845 = vpop.f32.mrb[0].mxu0
    %v846 = vadd.f32 0.0, %v845
    %v847 = vpop.f32.mrb[0].mxu0
    %v848 = vpop.f32.mrb[0].mxu0
    %v849 = vadd.f32 0.0, %v848
    %v850 = vpop.f32.mrb[0].mxu0
    %851 = vmatprep.mubr.bf16.mxu0 %v726
    %852 = vmatmul.mubr.bf16.gmra.mrb[0].mxu0 %v725
    %v853 = vpop.f32.mrb[0].mxu0
    %v854 = vadd.f32 0.0, %v853
    %v855 = vpop.f32.mrb[0].mxu0
    %v856 = vpop.f32.mrb[0].mxu0
    %v857 = vadd.f32 0.0, %v856
    %v858 = vpop.f32.mrb[0].mxu0
    %859 = vmatprep.mubr.bf16.mxu0 %v728
    %860 = vmatmul.mubr.bf16.gmra.mrb[0].mxu0 %v727
    %v861 = vpop.f32.mrb[0].mxu0
    %v862 = vadd.f32 0.0, %v861
    %v863 = vpop.f32.mrb[0].mxu0
    %v864 = vpop.f32.mrb[0].mxu0
    %v865 = vadd.f32 0.0, %v864
    %v866 = vpop.f32.mrb[0].mxu0
    %867 = vmatprep.mubr.bf16.mxu0 %v730
    %868 = vmatmul.mubr.bf16.gmra.mrb[0].mxu0 %v729
    %v869 = vpop.f32.mrb[0].mxu0
    %v870 = vadd.f32 0.0, %v869
    %v871 = vpop.f32.mrb[0].mxu0
    %v872 = vpop.f32.mrb[0].mxu0
    %v873 = vadd.f32 0.0, %v872
    %v874 = vpop.f32.mrb[0].mxu0
    %875 = vmatprep.mubr.bf16.mxu0 %v732
    %876 = vmatmul.mubr.bf16.gmra.mrb[0].mxu0 %v731
    %v877 = vpop.f32.mrb[0].mxu0
    %v878 = vadd.f32 0.0, %v877
    %v879 = vpop.f32.mrb[0].mxu0
    %v880 = vpop.f32.mrb[0].mxu0
    %v881 = vadd.f32 0.0, %v880
    %v882 = vpop.f32.mrb[0].mxu0
    %883 = vmatprep.mubr.bf16.mxu0 %v734
    %884 = vmatmul.mubr.bf16.gmra.mrb[0].mxu0 %v733
    %v885 = vpop.f32.mrb[0].mxu0
    %v886 = vadd.f32 0.0, %v885
    %v887 = vpop.f32.mrb[0].mxu0
    %v888 = vpop.f32.mrb[0].mxu0
    %v889 = vadd.f32 0.0, %v888
    %v890 = vpop.f32.mrb[0].mxu0
    %891 = vmatprep.mubr.bf16.mxu0 %v736
    %892 = vmatmul.mubr.bf16.gmra.mrb[0].mxu0 %v735
    %v893 = vpop.f32.mrb[0].mxu0
    %v894 = vadd.f32 0.0, %v893
    %v895 = vpop.f32.mrb[0].mxu0
    %v896 = vpop.f32.mrb[0].mxu0
    %v897 = vadd.f32 0.0, %v896
    %v898 = vpop.f32.mrb[0].mxu0
    %899 = vmatprep.mubr.bf16.mxu0 %v738
    %900 = vmatmul.mubr.bf16.gmra.mrb[0].mxu0 %v737
    %v901 = vpop.f32.mrb[0].mxu0
    %v902 = vadd.f32 0.0, %v901
    %v903 = vpop.f32.mrb[0].mxu0
    %v904 = vpop.f32.mrb[0].mxu0
    %v905 = vadd.f32 0.0, %v904
    %v906 = vpop.f32.mrb[0].mxu0
    %907 = vmatprep.mubr.bf16.mxu0 %v740
    %908 = vmatmul.mubr.bf16.gmra.mrb[0].mxu0 %v739
    %v909 = vpop.f32.mrb[0].mxu0
    %v910 = vadd.f32 0.0, %v909
    %v911 = vpop.f32.mrb[0].mxu0
    %v912 = vpop.f32.mrb[0].mxu0
    %v913 = vadd.f32 0.0, %v912
    %v914 = vpop.f32.mrb[0].mxu0
    %915 = vmatprep.mubr.bf16.mxu0 %v742
    %916 = vmatmul.mubr.bf16.gmra.mrb[0].mxu0 %v741
    %v917 = vpop.f32.mrb[0].mxu0
    %v918 = vadd.f32 0.0, %v917
    %v919 = vpop.f32.mrb[0].mxu0
    %v920 = vpop.f32.mrb[0].mxu0
    %v921 = vadd.f32 0.0, %v920
    %v922 = vpop.f32.mrb[0].mxu0
    %923 = vmatprep.mubr.bf16.mxu0 %v744
    %924 = vmatmul.mubr.bf16.gmra.mrb[0].mxu0 %v743
    %v925 = vpop.f32.mrb[0].mxu0
    %v926 = vadd.f32 0.0, %v925
    %v927 = vpop.f32.mrb[0].mxu0
    %v928 = vpop.f32.mrb[0].mxu0
    %v929 = vadd.f32 0.0, %v928
    %v930 = vpop.f32.mrb[0].mxu0
    %931 = vmatprep.mubr.bf16.mxu0 %v746
    %932 = vmatmul.mubr.bf16.gmra.mrb[0].mxu0 %v745
    %v933 = vpop.f32.mrb[0].mxu0
    %v934 = vadd.f32 0.0, %v933
    %v935 = vpop.f32.mrb[0].mxu0
    %v936 = vpop.f32.mrb[0].mxu0
    %v937 = vadd.f32 0.0, %v936
    %v938 = vpop.f32.mrb[0].mxu0
    %939 = vdwg.mxu0
    %v940 = vadd.f32 %v506, %v814
    %v941 = vadd.f32 %v507, %v817
    %v942 = vadd.f32 %v508, %v822
    %v943 = vadd.f32 %v509, %v825
    %v944 = vadd.f32 %v510, %v830
    %v945 = vadd.f32 %v511, %v833
    %v946 = vadd.f32 %v512, %v838
    %v947 = vadd.f32 %v513, %v841
    %v948 = vadd.f32 %v514, %v846
    %v949 = vadd.f32 %v515, %v849
    %v950 = vadd.f32 %v516, %v854
    %v951 = vadd.f32 %v517, %v857
    %v952 = vadd.f32 %v518, %v862
    %v953 = vadd.f32 %v519, %v865
    %v954 = vadd.f32 %v520, %v870
    %v955 = vadd.f32 %v521, %v873
    %v956 = vadd.f32 %v522, %v878
    %v957 = vadd.f32 %v523, %v881
    %v958 = vadd.f32 %v524, %v886
    %v959 = vadd.f32 %v525, %v889
    %v960 = vadd.f32 %v526, %v894
    %v961 = vadd.f32 %v527, %v897
    %v962 = vadd.f32 %v528, %v902
    %v963 = vadd.f32 %v529, %v905
    %v964 = vadd.f32 %v530, %v910
    %v965 = vadd.f32 %v531, %v913
    %v966 = vadd.f32 %v532, %v918
    %v967 = vadd.f32 %v533, %v921
    %v968 = vadd.f32 %v534, %v926
    %v969 = vadd.f32 %v535, %v929
    %v970 = vadd.f32 %v536, %v934
    %v971 = vadd.f32 %v537, %v937
    %v972 = vmul.f32 %v940, 0.5
    %v973 = vmul.f32 %v941, 0.5
    %v974 = vmul.f32 %v942, 0.5
    %v975 = vmul.f32 %v943, 0.5
    %v976 = vmul.f32 %v944, 0.5
    %v977 = vmul.f32 %v945, 0.5
    %v978 = vmul.f32 %v946, 0.5
    %v979 = vmul.f32 %v947, 0.5
    %v980 = vmul.f32 %v948, 0.5
    %v981 = vmul.f32 %v949, 0.5
    %v982 = vmul.f32 %v950, 0.5
    %v983 = vmul.f32 %v951, 0.5
    %v984 = vmul.f32 %v952, 0.5
    %v985 = vmul.f32 %v953, 0.5
    %v986 = vmul.f32 %v954, 0.5
    %v987 = vmul.f32 %v955, 0.5
    %v988 = vmul.f32 %v956, 0.5
    %v989 = vmul.f32 %v957, 0.5
    %v990 = vmul.f32 %v958, 0.5
    %v991 = vmul.f32 %v959, 0.5
    %v992 = vmul.f32 %v960, 0.5
    %v993 = vmul.f32 %v961, 0.5
    %v994 = vmul.f32 %v962, 0.5
    %v995 = vmul.f32 %v963, 0.5
    %v996 = vmul.f32 %v964, 0.5
    %v997 = vmul.f32 %v965, 0.5
    %v998 = vmul.f32 %v966, 0.5
    %v999 = vmul.f32 %v967, 0.5
    %v1000 = vmul.f32 %v968, 0.5
    %v1001 = vmul.f32 %v969, 0.5
    %v1002 = vmul.f32 %v970, 0.5
    %v1003 = vmul.f32 %v971, 0.5
    %s1004 = scalar_lea.vmem [#allocation7], 512
    %1005 = vst [vmem:[%s1004] sm:$0xff] %v972
    %1006 = vst [vmem:[%s1004 + $0x8] sm:$0xff] %v973
    %1007 = vst [vmem:[%s1004 + $0x10] sm:$0xff] %v974
    %1008 = vst [vmem:[%s1004 + $0x18] sm:$0xff] %v975
    %1009 = vst [vmem:[%s1004 + $0x20] sm:$0xff] %v976
    %1010 = vst [vmem:[%s1004 + $0x28] sm:$0xff] %v977
    %1011 = vst [vmem:[%s1004 + $0x30] sm:$0xff] %v978
    %1012 = vst [vmem:[%s1004 + $0x38] sm:$0xff] %v979
    %1013 = vst [vmem:[%s1004 + $0x40] sm:$0xff] %v980
    %1014 = vst [vmem:[%s1004 + $0x48] sm:$0xff] %v981
    %1015 = vst [vmem:[%s1004 + $0x50] sm:$0xff] %v982
    %1016 = vst [vmem:[%s1004 + $0x58] sm:$0xff] %v983
    %1017 = vst [vmem:[%s1004 + $0x60] sm:$0xff] %v984
    %1018 = vst [vmem:[%s1004 + $0x68] sm:$0xff] %v985
    %1019 = vst [vmem:[%s1004 + $0x70] sm:$0xff] %v986
    %1020 = vst [vmem:[%s1004 + $0x78] sm:$0xff] %v987
    %1021 = vst [vmem:[%s1004 + $0x80] sm:$0xff] %v988
    %1022 = vst [vmem:[%s1004 + $0x88] sm:$0xff] %v989
    %1023 = vst [vmem:[%s1004 + $0x90] sm:$0xff] %v990
    %1024 = vst [vmem:[%s1004 + $0x98] sm:$0xff] %v991
    %1025 = vst [vmem:[%s1004 + $0xa0] sm:$0xff] %v992
    %1026 = vst [vmem:[%s1004 + $0xa8] sm:$0xff] %v993
    %1027 = vst [vmem:[%s1004 + $0xb0] sm:$0xff] %v994
    %1028 = vst [vmem:[%s1004 + $0xb8] sm:$0xff] %v995
    %1029 = vst [vmem:[%s1004 + $0xc0] sm:$0xff] %v996
    %1030 = vst [vmem:[%s1004 + $0xc8] sm:$0xff] %v997
    %1031 = vst [vmem:[%s1004 + $0xd0] sm:$0xff] %v998
    %1032 = vst [vmem:[%s1004 + $0xd8] sm:$0xff] %v999
    %1033 = vst [vmem:[%s1004 + $0xe0] sm:$0xff] %v1000
    %1034 = vst [vmem:[%s1004 + $0xe8] sm:$0xff] %v1001
    %1035 = vst [vmem:[%s1004 + $0xf0] sm:$0xff] %v1002
    %1036 = vst [vmem:[%s1004 + $0xf8] sm:$0xff] %v1003
    %v1037 = vld [vmem:[#allocation2] sm:$0xff]
    %v1038 = vld [vmem:[#allocation2 + $0x8] sm:$0xff]
    %v1039 = vld [vmem:[#allocation2 + $0x10] sm:$0xff]
    %v1040 = vld [vmem:[#allocation2 + $0x18] sm:$0xff]
    %v1041 = vld [vmem:[#allocation2 + $0x20] sm:$0xff]
    %v1042 = vld [vmem:[#allocation2 + $0x28] sm:$0xff]
    %v1043 = vld [vmem:[#allocation2 + $0x30] sm:$0xff]
    %v1044 = vld [vmem:[#allocation2 + $0x38] sm:$0xff]
    %v1045 = vld [vmem:[#allocation2 + $0x40] sm:$0xff]
    %v1046 = vld [vmem:[#allocation2 + $0x48] sm:$0xff]
    %v1047 = vld [vmem:[#allocation2 + $0x50] sm:$0xff]
    %v1048 = vld [vmem:[#allocation2 + $0x58] sm:$0xff]
    %v1049 = vld [vmem:[#allocation2 + $0x60] sm:$0xff]
    %v1050 = vld [vmem:[#allocation2 + $0x68] sm:$0xff]
    %v1051 = vld [vmem:[#allocation2 + $0x70] sm:$0xff]
    %v1052 = vld [vmem:[#allocation2 + $0x78] sm:$0xff]
    %v1053 = vld [vmem:[#allocation2 + $0x80] sm:$0xff]
    %v1054 = vld [vmem:[#allocation2 + $0x88] sm:$0xff]
    %v1055 = vld [vmem:[#allocation2 + $0x90] sm:$0xff]
    %v1056 = vld [vmem:[#allocation2 + $0x98] sm:$0xff]
    %v1057 = vld [vmem:[#allocation2 + $0xa0] sm:$0xff]
    %v1058 = vld [vmem:[#allocation2 + $0xa8] sm:$0xff]
    %v1059 = vld [vmem:[#allocation2 + $0xb0] sm:$0xff]
    %v1060 = vld [vmem:[#allocation2 + $0xb8] sm:$0xff]
    %v1061 = vld [vmem:[#allocation2 + $0xc0] sm:$0xff]
    %v1062 = vld [vmem:[#allocation2 + $0xc8] sm:$0xff]
    %v1063 = vld [vmem:[#allocation2 + $0xd0] sm:$0xff]
    %v1064 = vld [vmem:[#allocation2 + $0xd8] sm:$0xff]
    %v1065 = vld [vmem:[#allocation2 + $0xe0] sm:$0xff]
    %v1066 = vld [vmem:[#allocation2 + $0xe8] sm:$0xff]
    %v1067 = vld [vmem:[#allocation2 + $0xf0] sm:$0xff]
    %v1068 = vld [vmem:[#allocation2 + $0xf8] sm:$0xff]
    %v1069 = vpack.c.bf16 %v973, %v972
    %v1070 = vpack.c.bf16 %v975, %v974
    %v1071 = vpack.c.bf16 %v977, %v976
    %v1072 = vpack.c.bf16 %v979, %v978
    %v1073 = vpack.c.bf16 %v981, %v980
    %v1074 = vpack.c.bf16 %v983, %v982
    %v1075 = vpack.c.bf16 %v985, %v984
    %v1076 = vpack.c.bf16 %v987, %v986
    %v1077 = vpack.c.bf16 %v989, %v988
    %v1078 = vpack.c.bf16 %v991, %v990
    %v1079 = vpack.c.bf16 %v993, %v992
    %v1080 = vpack.c.bf16 %v995, %v994
    %v1081 = vpack.c.bf16 %v997, %v996
    %v1082 = vpack.c.bf16 %v999, %v998
    %v1083 = vpack.c.bf16 %v1001, %v1000
    %v1084 = vpack.c.bf16 %v1003, %v1002
    %v1117 = vunpack.c.l.b16 %v1037
    %v1118 = vunpack.c.h.b16 %v1037
    %v1119 = vunpack.c.l.b16 %v1038
    %v1120 = vunpack.c.h.b16 %v1038
    %v1121 = vunpack.c.l.b16 %v1039
    %v1122 = vunpack.c.h.b16 %v1039
    %v1123 = vunpack.c.l.b16 %v1040
    %v1124 = vunpack.c.h.b16 %v1040
    %v1125 = vunpack.c.l.b16 %v1041
    %v1126 = vunpack.c.h.b16 %v1041
    %v1127 = vunpack.c.l.b16 %v1042
    %v1128 = vunpack.c.h.b16 %v1042
    %v1129 = vunpack.c.l.b16 %v1043
    %v1130 = vunpack.c.h.b16 %v1043
    %v1131 = vunpack.c.l.b16 %v1044
    %v1132 = vunpack.c.h.b16 %v1044
    %v1133 = vunpack.c.l.b16 %v1045
    %v1134 = vunpack.c.h.b16 %v1045
    %v1135 = vunpack.c.l.b16 %v1046
    %v1136 = vunpack.c.h.b16 %v1046
    %v1137 = vunpack.c.l.b16 %v1047
    %v1138 = vunpack.c.h.b16 %v1047
    %v1139 = vunpack.c.l.b16 %v1048
    %v1140 = vunpack.c.h.b16 %v1048
    %v1141 = vunpack.c.l.b16 %v1049
    %v1142 = vunpack.c.h.b16 %v1049
    %v1143 = vunpack.c.l.b16 %v1050
    %v1144 = vunpack.c.h.b16 %v1050
    %v1145 = vunpack.c.l.b16 %v1051
    %v1146 = vunpack.c.h.b16 %v1051
    %v1147 = vunpack.c.l.b16 %v1052
    %v1148 = vunpack.c.h.b16 %v1052
    %v1149 = vunpack.c.l.b16 %v1053
    %v1150 = vunpack.c.h.b16 %v1053
    %v1151 = vunpack.c.l.b16 %v1054
    %v1152 = vunpack.c.h.b16 %v1054
    %v1153 = vunpack.c.l.b16 %v1055
    %v1154 = vunpack.c.h.b16 %v1055
    %v1155 = vunpack.c.l.b16 %v1056
    %v1156 = vunpack.c.h.b16 %v1056
    %v1157 = vunpack.c.l.b16 %v1057
    %v1158 = vunpack.c.h.b16 %v1057
    %v1159 = vunpack.c.l.b16 %v1058
    %v1160 = vunpack.c.h.b16 %v1058
    %v1161 = vunpack.c.l.b16 %v1059
    %v1162 = vunpack.c.h.b16 %v1059
    %v1163 = vunpack.c.l.b16 %v1060
    %v1164 = vunpack.c.h.b16 %v1060
    %v1165 = vunpack.c.l.b16 %v1061
    %v1166 = vunpack.c.h.b16 %v1061
    %v1167 = vunpack.c.l.b16 %v1062
    %v1168 = vunpack.c.h.b16 %v1062
    %v1169 = vunpack.c.l.b16 %v1063
    %v1170 = vunpack.c.h.b16 %v1063
    %v1171 = vunpack.c.l.b16 %v1064
    %v1172 = vunpack.c.h.b16 %v1064
    %v1173 = vunpack.c.l.b16 %v1065
    %v1174 = vunpack.c.h.b16 %v1065
    %v1175 = vunpack.c.l.b16 %v1066
    %v1176 = vunpack.c.h.b16 %v1066
    %v1177 = vunpack.c.l.b16 %v1067
    %v1178 = vunpack.c.h.b16 %v1067
    %v1179 = vunpack.c.l.b16 %v1068
    %v1180 = vunpack.c.h.b16 %v1068
    %v1181 = vpack.c.b16 %v1119, %v1117
    %v1182 = vpack.c.b16 %v1120, %v1118
    %v1183 = vpack.c.b16 %v1123, %v1121
    %v1184 = vpack.c.b16 %v1124, %v1122
    %v1185 = vpack.c.b16 %v1127, %v1125
    %v1186 = vpack.c.b16 %v1128, %v1126
    %v1187 = vpack.c.b16 %v1131, %v1129
    %v1188 = vpack.c.b16 %v1132, %v1130
    %v1189 = vpack.c.b16 %v1135, %v1133
    %v1190 = vpack.c.b16 %v1136, %v1134
    %v1191 = vpack.c.b16 %v1139, %v1137
    %v1192 = vpack.c.b16 %v1140, %v1138
    %v1193 = vpack.c.b16 %v1143, %v1141
    %v1194 = vpack.c.b16 %v1144, %v1142
    %v1195 = vpack.c.b16 %v1147, %v1145
    %v1196 = vpack.c.b16 %v1148, %v1146
    %v1197 = vpack.c.b16 %v1151, %v1149
    %v1198 = vpack.c.b16 %v1152, %v1150
    %v1199 = vpack.c.b16 %v1155, %v1153
    %v1200 = vpack.c.b16 %v1156, %v1154
    %v1201 = vpack.c.b16 %v1159, %v1157
    %v1202 = vpack.c.b16 %v1160, %v1158
    %v1203 = vpack.c.b16 %v1163, %v1161
    %v1204 = vpack.c.b16 %v1164, %v1162
    %v1205 = vpack.c.b16 %v1167, %v1165
    %v1206 = vpack.c.b16 %v1168, %v1166
    %v1207 = vpack.c.b16 %v1171, %v1169
    %v1208 = vpack.c.b16 %v1172, %v1170
    %v1209 = vpack.c.b16 %v1175, %v1173
    %v1210 = vpack.c.b16 %v1176, %v1174
    %v1211 = vpack.c.b16 %v1179, %v1177
    %v1212 = vpack.c.b16 %v1180, %v1178
    %1245 = vmatprep.subr.bf16.mxu0 0
    %1246 = vmatpush1.bf16.msra.mxu0 %v1069
    %1247 = vmatprep.subr.bf16.mxu0 0
    %1248 = vmatpush1.bf16.msra.mxu0 %v1070
    %1249 = vmatprep.subr.bf16.mxu0 0
    %1250 = vmatpush1.bf16.msra.mxu0 %v1071
    %1251 = vmatprep.subr.bf16.mxu0 0
    %1252 = vmatpush1.bf16.msra.mxu0 %v1072
    %1253 = vmatprep.subr.bf16.mxu0 0
    %1254 = vmatpush1.bf16.msra.mxu0 %v1073
    %1255 = vmatprep.subr.bf16.mxu0 0
    %1256 = vmatpush1.bf16.msra.mxu0 %v1074
    %1257 = vmatprep.subr.bf16.mxu0 0
    %1258 = vmatpush1.bf16.msra.mxu0 %v1075
    %1259 = vmatprep.subr.bf16.mxu0 0
    %1260 = vmatpush1.bf16.msra.mxu0 %v1076
    %1261 = vmatprep.subr.bf16.mxu0 0
    %1262 = vmatpush1.bf16.msra.mxu0 %v1077
    %1263 = vmatprep.subr.bf16.mxu0 0
    %1264 = vmatpush1.bf16.msra.mxu0 %v1078
    %1265 = vmatprep.subr.bf16.mxu0 0
    %1266 = vmatpush1.bf16.msra.mxu0 %v1079
    %1267 = vmatprep.subr.bf16.mxu0 0
    %1268 = vmatpush1.bf16.msra.mxu0 %v1080
    %1269 = vmatprep.subr.bf16.mxu0 0
    %1270 = vmatpush1.bf16.msra.mxu0 %v1081
    %1271 = vmatprep.subr.bf16.mxu0 0
    %1272 = vmatpush1.bf16.msra.mxu0 %v1082
    %1273 = vmatprep.subr.bf16.mxu0 0
    %1274 = vmatpush1.bf16.msra.mxu0 %v1083
    %1275 = vmatprep.subr.bf16.mxu0 0
    %1276 = vmatpush1.bf16.msra.mxu0 %v1084
    %1277 = vmatprep.mubr.bf16.mxu0 %v1182
    %1278 = vmatmul.mubr.bf16.gmra.mrb[0].mxu0 %v1181
    %v1279 = vpop.f32.mrb[0].mxu0
    %v1280 = vadd.f32 0.0, %v1279
    %v1281 = vpop.f32.mrb[0].mxu0
    %v1282 = vpop.f32.mrb[0].mxu0
    %v1283 = vadd.f32 0.0, %v1282
    %v1284 = vpop.f32.mrb[0].mxu0
    %1285 = vmatprep.mubr.bf16.mxu0 %v1184
    %1286 = vmatmul.mubr.bf16.gmra.mrb[0].mxu0 %v1183
    %v1287 = vpop.f32.mrb[0].mxu0
    %v1288 = vadd.f32 0.0, %v1287
    %v1289 = vpop.f32.mrb[0].mxu0
    %v1290 = vpop.f32.mrb[0].mxu0
    %v1291 = vadd.f32 0.0, %v1290
    %v1292 = vpop.f32.mrb[0].mxu0
    %1293 = vmatprep.mubr.bf16.mxu0 %v1186
    %1294 = vmatmul.mubr.bf16.gmra.mrb[0].mxu0 %v1185
    %v1295 = vpop.f32.mrb[0].mxu0
    %v1296 = vadd.f32 0.0, %v1295
    %v1297 = vpop.f32.mrb[0].mxu0
    %v1298 = vpop.f32.mrb[0].mxu0
    %v1299 = vadd.f32 0.0, %v1298
    %v1300 = vpop.f32.mrb[0].mxu0
    %1301 = vmatprep.mubr.bf16.mxu0 %v1188
    %1302 = vmatmul.mubr.bf16.gmra.mrb[0].mxu0 %v1187
    %v1303 = vpop.f32.mrb[0].mxu0
    %v1304 = vadd.f32 0.0, %v1303
    %v1305 = vpop.f32.mrb[0].mxu0
    %v1306 = vpop.f32.mrb[0].mxu0
    %v1307 = vadd.f32 0.0, %v1306
    %v1308 = vpop.f32.mrb[0].mxu0
    %1309 = vmatprep.mubr.bf16.mxu0 %v1190
    %1310 = vmatmul.mubr.bf16.gmra.mrb[0].mxu0 %v1189
    %v1311 = vpop.f32.mrb[0].mxu0
    %v1312 = vadd.f32 0.0, %v1311
    %v1313 = vpop.f32.mrb[0].mxu0
    %v1314 = vpop.f32.mrb[0].mxu0
    %v1315 = vadd.f32 0.0, %v1314
    %v1316 = vpop.f32.mrb[0].mxu0
    %1317 = vmatprep.mubr.bf16.mxu0 %v1192
    %1318 = vmatmul.mubr.bf16.gmra.mrb[0].mxu0 %v1191
    %v1319 = vpop.f32.mrb[0].mxu0
    %v1320 = vadd.f32 0.0, %v1319
    %v1321 = vpop.f32.mrb[0].mxu0
    %v1322 = vpop.f32.mrb[0].mxu0
    %v1323 = vadd.f32 0.0, %v1322
    %v1324 = vpop.f32.mrb[0].mxu0
    %1325 = vmatprep.mubr.bf16.mxu0 %v1194
    %1326 = vmatmul.mubr.bf16.gmra.mrb[0].mxu0 %v1193
    %v1327 = vpop.f32.mrb[0].mxu0
    %v1328 = vadd.f32 0.0, %v1327
    %v1329 = vpop.f32.mrb[0].mxu0
    %v1330 = vpop.f32.mrb[0].mxu0
    %v1331 = vadd.f32 0.0, %v1330
    %v1332 = vpop.f32.mrb[0].mxu0
    %1333 = vmatprep.mubr.bf16.mxu0 %v1196
    %1334 = vmatmul.mubr.bf16.gmra.mrb[0].mxu0 %v1195
    %v1335 = vpop.f32.mrb[0].mxu0
    %v1336 = vadd.f32 0.0, %v1335
    %v1337 = vpop.f32.mrb[0].mxu0
    %v1338 = vpop.f32.mrb[0].mxu0
    %v1339 = vadd.f32 0.0, %v1338
    %v1340 = vpop.f32.mrb[0].mxu0
    %1341 = vmatprep.mubr.bf16.mxu0 %v1198
    %1342 = vmatmul.mubr.bf16.gmra.mrb[0].mxu0 %v1197
    %v1343 = vpop.f32.mrb[0].mxu0
    %v1344 = vadd.f32 0.0, %v1343
    %v1345 = vpop.f32.mrb[0].mxu0
    %v1346 = vpop.f32.mrb[0].mxu0
    %v1347 = vadd.f32 0.0, %v1346
    %v1348 = vpop.f32.mrb[0].mxu0
    %1349 = vmatprep.mubr.bf16.mxu0 %v1200
    %1350 = vmatmul.mubr.bf16.gmra.mrb[0].mxu0 %v1199
    %v1351 = vpop.f32.mrb[0].mxu0
    %v1352 = vadd.f32 0.0, %v1351
    %v1353 = vpop.f32.mrb[0].mxu0
    %v1354 = vpop.f32.mrb[0].mxu0
    %v1355 = vadd.f32 0.0, %v1354
    %v1356 = vpop.f32.mrb[0].mxu0
    %1357 = vmatprep.mubr.bf16.mxu0 %v1202
    %1358 = vmatmul.mubr.bf16.gmra.mrb[0].mxu0 %v1201
    %v1359 = vpop.f32.mrb[0].mxu0
    %v1360 = vadd.f32 0.0, %v1359
    %v1361 = vpop.f32.mrb[0].mxu0
    %v1362 = vpop.f32.mrb[0].mxu0
    %v1363 = vadd.f32 0.0, %v1362
    %v1364 = vpop.f32.mrb[0].mxu0
    %1365 = vmatprep.mubr.bf16.mxu0 %v1204
    %1366 = vmatmul.mubr.bf16.gmra.mrb[0].mxu0 %v1203
    %v1367 = vpop.f32.mrb[0].mxu0
    %v1368 = vadd.f32 0.0, %v1367
    %v1369 = vpop.f32.mrb[0].mxu0
    %v1370 = vpop.f32.mrb[0].mxu0
    %v1371 = vadd.f32 0.0, %v1370
    %v1372 = vpop.f32.mrb[0].mxu0
    %1373 = vmatprep.mubr.bf16.mxu0 %v1206
    %1374 = vmatmul.mubr.bf16.gmra.mrb[0].mxu0 %v1205
    %v1375 = vpop.f32.mrb[0].mxu0
    %v1376 = vadd.f32 0.0, %v1375
    %v1377 = vpop.f32.mrb[0].mxu0
    %v1378 = vpop.f32.mrb[0].mxu0
    %v1379 = vadd.f32 0.0, %v1378
    %v1380 = vpop.f32.mrb[0].mxu0
    %1381 = vmatprep.mubr.bf16.mxu0 %v1208
    %1382 = vmatmul.mubr.bf16.gmra.mrb[0].mxu0 %v1207
    %v1383 = vpop.f32.mrb[0].mxu0
    %v1384 = vadd.f32 0.0, %v1383
    %v1385 = vpop.f32.mrb[0].mxu0
    %v1386 = vpop.f32.mrb[0].mxu0
    %v1387 = vadd.f32 0.0, %v1386
    %v1388 = vpop.f32.mrb[0].mxu0
    %1389 = vmatprep.mubr.bf16.mxu0 %v1210
    %1390 = vmatmul.mubr.bf16.gmra.mrb[0].mxu0 %v1209
    %v1391 = vpop.f32.mrb[0].mxu0
    %v1392 = vadd.f32 0.0, %v1391
    %v1393 = vpop.f32.mrb[0].mxu0
    %v1394 = vpop.f32.mrb[0].mxu0
    %v1395 = vadd.f32 0.0, %v1394
    %v1396 = vpop.f32.mrb[0].mxu0
    %1397 = vmatprep.mubr.bf16.mxu0 %v1212
    %1398 = vmatmul.mubr.bf16.gmra.mrb[0].mxu0 %v1211
    %v1399 = vpop.f32.mrb[0].mxu0
    %v1400 = vadd.f32 0.0, %v1399
    %v1401 = vpop.f32.mrb[0].mxu0
    %v1402 = vpop.f32.mrb[0].mxu0
    %v1403 = vadd.f32 0.0, %v1402
    %v1404 = vpop.f32.mrb[0].mxu0
    %1405 = vdwg.mxu0
    %v1406 = vadd.f32 %v972, %v1280
    %v1407 = vadd.f32 %v973, %v1283
    %v1408 = vadd.f32 %v974, %v1288
    %v1409 = vadd.f32 %v975, %v1291
    %v1410 = vadd.f32 %v976, %v1296
    %v1411 = vadd.f32 %v977, %v1299
    %v1412 = vadd.f32 %v978, %v1304
    %v1413 = vadd.f32 %v979, %v1307
    %v1414 = vadd.f32 %v980, %v1312
    %v1415 = vadd.f32 %v981, %v1315
    %v1416 = vadd.f32 %v982, %v1320
    %v1417 = vadd.f32 %v983, %v1323
    %v1418 = vadd.f32 %v984, %v1328
    %v1419 = vadd.f32 %v985, %v1331
    %v1420 = vadd.f32 %v986, %v1336
    %v1421 = vadd.f32 %v987, %v1339
    %v1422 = vadd.f32 %v988, %v1344
    %v1423 = vadd.f32 %v989, %v1347
    %v1424 = vadd.f32 %v990, %v1352
    %v1425 = vadd.f32 %v991, %v1355
    %v1426 = vadd.f32 %v992, %v1360
    %v1427 = vadd.f32 %v993, %v1363
    %v1428 = vadd.f32 %v994, %v1368
    %v1429 = vadd.f32 %v995, %v1371
    %v1430 = vadd.f32 %v996, %v1376
    %v1431 = vadd.f32 %v997, %v1379
    %v1432 = vadd.f32 %v998, %v1384
    %v1433 = vadd.f32 %v999, %v1387
    %v1434 = vadd.f32 %v1000, %v1392
    %v1435 = vadd.f32 %v1001, %v1395
    %v1436 = vadd.f32 %v1002, %v1400
    %v1437 = vadd.f32 %v1003, %v1403
    %v1438 = vmul.f32 %v1406, 0.5
    %v1439 = vmul.f32 %v1407, 0.5
    %v1440 = vmul.f32 %v1408, 0.5
    %v1441 = vmul.f32 %v1409, 0.5
    %v1442 = vmul.f32 %v1410, 0.5
    %v1443 = vmul.f32 %v1411, 0.5
    %v1444 = vmul.f32 %v1412, 0.5
    %v1445 = vmul.f32 %v1413, 0.5
    %v1446 = vmul.f32 %v1414, 0.5
    %v1447 = vmul.f32 %v1415, 0.5
    %v1448 = vmul.f32 %v1416, 0.5
    %v1449 = vmul.f32 %v1417, 0.5
    %v1450 = vmul.f32 %v1418, 0.5
    %v1451 = vmul.f32 %v1419, 0.5
    %v1452 = vmul.f32 %v1420, 0.5
    %v1453 = vmul.f32 %v1421, 0.5
    %v1454 = vmul.f32 %v1422, 0.5
    %v1455 = vmul.f32 %v1423, 0.5
    %v1456 = vmul.f32 %v1424, 0.5
    %v1457 = vmul.f32 %v1425, 0.5
    %v1458 = vmul.f32 %v1426, 0.5
    %v1459 = vmul.f32 %v1427, 0.5
    %v1460 = vmul.f32 %v1428, 0.5
    %v1461 = vmul.f32 %v1429, 0.5
    %v1462 = vmul.f32 %v1430, 0.5
    %v1463 = vmul.f32 %v1431, 0.5
    %v1464 = vmul.f32 %v1432, 0.5
    %v1465 = vmul.f32 %v1433, 0.5
    %v1466 = vmul.f32 %v1434, 0.5
    %v1467 = vmul.f32 %v1435, 0.5
    %v1468 = vmul.f32 %v1436, 0.5
    %v1469 = vmul.f32 %v1437, 0.5
    %s1470 = scalar_lea.vmem [#allocation7], 768
    %1471 = vst [vmem:[%s1470] sm:$0xff] %v1438
    %1472 = vst [vmem:[%s1470 + $0x8] sm:$0xff] %v1439
    %1473 = vst [vmem:[%s1470 + $0x10] sm:$0xff] %v1440
    %1474 = vst [vmem:[%s1470 + $0x18] sm:$0xff] %v1441
    %1475 = vst [vmem:[%s1470 + $0x20] sm:$0xff] %v1442
    %1476 = vst [vmem:[%s1470 + $0x28] sm:$0xff] %v1443
    %1477 = vst [vmem:[%s1470 + $0x30] sm:$0xff] %v1444
    %1478 = vst [vmem:[%s1470 + $0x38] sm:$0xff] %v1445
    %1479 = vst [vmem:[%s1470 + $0x40] sm:$0xff] %v1446
    %1480 = vst [vmem:[%s1470 + $0x48] sm:$0xff] %v1447
    %1481 = vst [vmem:[%s1470 + $0x50] sm:$0xff] %v1448
    %1482 = vst [vmem:[%s1470 + $0x58] sm:$0xff] %v1449
    %1483 = vst [vmem:[%s1470 + $0x60] sm:$0xff] %v1450
    %1484 = vst [vmem:[%s1470 + $0x68] sm:$0xff] %v1451
    %1485 = vst [vmem:[%s1470 + $0x70] sm:$0xff] %v1452
    %1486 = vst [vmem:[%s1470 + $0x78] sm:$0xff] %v1453
    %1487 = vst [vmem:[%s1470 + $0x80] sm:$0xff] %v1454
    %1488 = vst [vmem:[%s1470 + $0x88] sm:$0xff] %v1455
    %1489 = vst [vmem:[%s1470 + $0x90] sm:$0xff] %v1456
    %1490 = vst [vmem:[%s1470 + $0x98] sm:$0xff] %v1457
    %1491 = vst [vmem:[%s1470 + $0xa0] sm:$0xff] %v1458
    %1492 = vst [vmem:[%s1470 + $0xa8] sm:$0xff] %v1459
    %1493 = vst [vmem:[%s1470 + $0xb0] sm:$0xff] %v1460
    %1494 = vst [vmem:[%s1470 + $0xb8] sm:$0xff] %v1461
    %1495 = vst [vmem:[%s1470 + $0xc0] sm:$0xff] %v1462
    %1496 = vst [vmem:[%s1470 + $0xc8] sm:$0xff] %v1463
    %1497 = vst [vmem:[%s1470 + $0xd0] sm:$0xff] %v1464
    %1498 = vst [vmem:[%s1470 + $0xd8] sm:$0xff] %v1465
    %1499 = vst [vmem:[%s1470 + $0xe0] sm:$0xff] %v1466
    %1500 = vst [vmem:[%s1470 + $0xe8] sm:$0xff] %v1467
    %1501 = vst [vmem:[%s1470 + $0xf0] sm:$0xff] %v1468
    %1502 = vst [vmem:[%s1470 + $0xf8] sm:$0xff] %v1469
    // Predicated region
    $region18: #{wwl_encoder_forward.1} parent=1 // pred_check
      _
    $region19: #{wwl_encoder_forward.1} parent=1 // pred_check_branch
      %1504 = sbr.rel (0) target = $region21
    $region20: #{wwl_encoder_forward.1} parent=1 // pred_region
      %s1506 = ssub.s32 16384, 16384
      %1507 = vsyncadd [#allocation4], %s1506
      %s1508 = sshll.u32 [#allocation7], 4
      %s1509 = int_to_ptr.vmem [resolvable:$true] %s1508
      %1514 = dma.vmem_to_hbm [thread:$0]  %s1509, 16384, %s2, [#allocation4], 128, 128, 8
    $region21: #{wwl_encoder_forward.1} parent=1 // pred_fallthru
      _
    // Predicated region
    $region22: #{wwl_encoder_forward.1} parent=1 // pred_check
      _
    $region23: #{wwl_encoder_forward.1} parent=1 // pred_check_branch
      %1516 = sbr.rel (0) target = $region25
    $region24: #{wwl_encoder_forward.1} parent=1 // pred_region
      %1517 = dma.done [#allocation4], 16384
    $region25: #{wwl_encoder_forward.1} parent=1 // pred_fallthru
      _
    %1518 = vsyncpa [#allocation3], 1
    %1519 = vsyncpa [#allocation6], 1
    %1520 = vsyncpa [#allocation4], 1

</llo_original>
